<compile_context>
chip_gen: v5e
topology: v5e:2x2
jax: 0.10.0
libtpu: 0.0.40
codegen_flags: <defaults>
</compile_context>

<pallas_src>
import functools

import jax
import jax.numpy as jnp
from jax.experimental import pallas as pl
from jax.experimental.pallas import tpu as pltpu


_LN_EPS = 1e-5


def _sublane(dtype) -> int:
    # Second-to-last block dim must be a multiple of this (8 f32 / 16 bf16 / 32 int8).
    return max(8, 32 // max(1, jnp.dtype(dtype).itemsize))


def _layernorm_f32(x):
    mean = jnp.mean(x, axis=-1, keepdims=True)
    cen = x - mean
    var = jnp.mean(cen * cen, axis=-1, keepdims=True)
    return cen * jax.lax.rsqrt(var + _LN_EPS)


@functools.lru_cache(maxsize=1)
def _vmem_caps():
    """(pipeline-buffer budget, scoped vmem limit) derived from this chip's VMEM."""
    cap = 64 << 20                       # conservative default (v7x-sized)
    try:
        info = pltpu.get_tpu_info()
        cap = int(getattr(info, "vmem_capacity_bytes", cap)) or cap
    except Exception:
        pass
    # ~44/56 MiB on 64 MiB parts (v7x), ~88/112 MiB on 128 MiB parts (v5e/v6e).
    return int(cap * 0.69), int(cap * 0.875)


@functools.lru_cache(maxsize=1)
def _single_buffer_ok() -> bool:
    """Probe: does pipeline_mode=pl.Buffered(1) lower for a grid-invariant operand?"""
    if not hasattr(pl, "Buffered"):
        return False
    try:
        def k(a_ref, w_ref, o_ref):
            o_ref[...] = a_ref[...] + w_ref[...]

        f = pl.pallas_call(
            k,
            out_shape=jax.ShapeDtypeStruct((16, 128), jnp.float32),
            grid=(2,),
            in_specs=[
                pl.BlockSpec((8, 128), lambda i: (i, 0)),
                pl.BlockSpec((8, 128), lambda i: (0, 0),
                             pipeline_mode=pl.Buffered(1)),
            ],
            out_specs=pl.BlockSpec((8, 128), lambda i: (i, 0)),
        )
        jax.jit(f).lower(
            jax.ShapeDtypeStruct((16, 128), jnp.float32),
            jax.ShapeDtypeStruct((8, 128), jnp.float32),
        ).compile()
        return True
    except Exception:
        return False


def _invariant_spec(shape, index_map):
    """BlockSpec for a grid-invariant operand; single-buffered when supported."""
    if _single_buffer_ok():
        return pl.BlockSpec(shape, index_map, pipeline_mode=pl.Buffered(1))
    return pl.BlockSpec(shape, index_map)


# --------------------------------------------------------------------------- kernels


def _expand_kernel(x_ref, w_ref, b_ref, o_ref, *, single_dot):
    """LayerNorm + expansion + pixel-shuffle for a (planes x rows) tile.

    x_ref: (TD, HH*WW, Cin)
    o_ref: (TD, 2, HH, 2, WW, C2)   laid out as (plane, p1, h, p2, w, (p3 c))
    w_ref: (Cin, 4*C2) if single_dot else (4, Cin, C2)   (gamma-folded weight)
    b_ref: (1, 4*C2)   if single_dot else (4, 1, C2)     (beta-folded bias)
    """
    td, _, hh, _, ww, c2 = o_ref.shape
    cin = x_ref.shape[-1]
    tok = td * hh * ww
    x = x_ref[...].astype(jnp.float32).reshape(tok, cin)
    xn = _layernorm_f32(x).astype(w_ref.dtype)
    if single_dot:
        y = jnp.dot(xn, w_ref[...], preferred_element_type=jnp.float32)
        y = y + b_ref[...].astype(jnp.float32)
        for p in range(4):                              # static unroll
            p1, p2 = divmod(p, 2)
            o_ref[:, p1, :, p2, :, :] = (
                y[:, p * c2:(p + 1) * c2].reshape(td, hh, ww, c2).astype(o_ref.dtype))
    else:
        for p in range(4):                              # static unroll
            p1, p2 = divmod(p, 2)
            y = jnp.dot(xn, w_ref[p], preferred_element_type=jnp.float32)
            y = y + b_ref[p].astype(jnp.float32)
            o_ref[:, p1, :, p2, :, :] = y.reshape(td, hh, ww, c2).astype(o_ref.dtype)


def _expand_quadrant_kernel(x_ref, w_ref, b_ref, o_ref):
    """Cout-tiled variant: one (p1, p2) output quadrant per grid step (big-weight guard).

    x_ref: (TD, HH*WW, Cin); w_ref: (1, Cin, C2); b_ref: (1, 1, C2)
    o_ref: (TD, 1, HH, 1, WW, C2)
    """
    td, _, hh, _, ww, c2 = o_ref.shape
    cin = x_ref.shape[-1]
    x = x_ref[...].astype(jnp.float32).reshape(td * hh * ww, cin)
    xn = _layernorm_f32(x).astype(w_ref.dtype)
    y = jnp.dot(xn, w_ref[0], preferred_element_type=jnp.float32)
    y = y + b_ref[0].astype(jnp.float32)
    o_ref[:, 0, :, 0, :, :] = y.reshape(td, hh, ww, c2).astype(o_ref.dtype)


def _flat_kernel(x_ref, w_ref, b_ref, o_ref):
    """LayerNorm + expansion on a flat token tile (pixel-shuffle left to XLA)."""
    xn = _layernorm_f32(x_ref[...].astype(jnp.float32)).astype(w_ref.dtype)
    y = jnp.dot(xn, w_ref[...], preferred_element_type=jnp.float32)
    o_ref[...] = (y + b_ref[...].astype(jnp.float32)).astype(o_ref.dtype)


# --------------------------------------------------------------------------- wrapper


def _max_tokens(cin, cout, x_bytes, out_bytes, resident_w_bytes, budget):
    # Double-buffered in/out tiles + in-kernel temporaries (f32 copy of x, bf16 xn,
    # f32 y), minus whatever weight stays resident.
    per_token = 2 * (cin * x_bytes + cout * out_bytes) + 4 * cout + 6 * cin
    avail = budget - resident_w_bytes - (1 << 20)
    if avail <= 0:
        return 0
    return avail // per_token


@functools.partial(
    jax.jit, static_argnames=("tile_tokens", "matmul_dtype", "out_dtype", "p_split"))
def patch_expanding(x, gamma, beta, w_t, *, tile_tokens=4096,
                    matmul_dtype=jnp.bfloat16, out_dtype=None, p_split=None):
    """PatchExpanding forward.

    x:     (B, D, H, W, 2*dim)
    gamma: (2*dim,)   LayerNorm weight
    beta:  (2*dim,)   LayerNorm bias
    w_t:   (2*dim, 8*dim)  transpose of nn.Linear(2*dim, 8*dim, bias=False).weight
    out_dtype: optional output dtype (e.g. jnp.bfloat16 to halve output HBM bytes)
    p_split:   None=auto, True/False force the cout-tiled (quadrant-per-step) path
    returns (B, 2*D, 2*H, 2*W, dim)
    """
    B, D, H, W, cin = x.shape
    dim = cin // 2
    c2 = 2 * dim
    cout = 8 * dim
    assert w_t.shape == (cin, cout)
    out_dtype = jnp.dtype(x.dtype) if out_dtype is None else jnp.dtype(out_dtype)

    # Fold the LayerNorm affine into the expansion:
    #   (xn*gamma + beta) @ W  ==  xn @ (gamma[:,None]*W)  +  beta @ W
    gamma = gamma.reshape(cin).astype(jnp.float32)
    beta = beta.reshape(cin).astype(jnp.float32)
    w32 = w_t.astype(jnp.float32)
    w_folded = (w32 * gamma[:, None]).astype(matmul_dtype)     # (Cin, Cout)
    bias = (beta @ w32).astype(jnp.float32)                    # (Cout,)

    budget, vmem_limit = _vmem_caps()
    x_bytes = jnp.dtype(x.dtype).itemsize
    o_bytes = jnp.dtype(out_dtype).itemsize
    w_bytes = cin * cout * jnp.dtype(matmul_dtype).itemsize
    w_bufs = 1 if _single_buffer_ok() else 2
    sub = _sublane(x.dtype)
    single_dot = (c2 % 128 == 0)

    hw = H * W
    bd = B * D

    def compiler(sem):
        return pltpu.CompilerParams(dimension_semantics=sem,
                                    vmem_limit_bytes=vmem_limit)

    # Tokens/step budget with the full weight resident vs. a quarter (cout-tiled).
    tok_full = min(tile_tokens,
                   _max_tokens(cin, cout, x_bytes, o_bytes, w_bufs * w_bytes, budget))
    tok_quad = min(tile_tokens,
                   _max_tokens(cin, cout, x_bytes, o_bytes, 2 * (w_bytes // 4), budget))

    def pick_td(max_tok):
        # Largest number of (b, d) planes per step: divides bd, fits the budget, and
        # leaves >= 2 grid steps (when bd >= 2) so both v7x TensorCores get work.
        cap = bd // 2 if bd >= 2 else 1
        best = 0
        for td in range(1, cap + 1):
            if bd % td == 0 and td * hw <= max_tok:
                best = td
        return best

    td_full = pick_td(tok_full)
    td_quad = pick_td(tok_quad)

    if p_split is None:
        if td_full == 0:
            use_quad = td_quad > 0
        else:
            # cout tiling only pays when the resident weight is what crushes the tile.
            use_quad = (td_full * hw < 1024) and (td_quad >= 4 * td_full)
    else:
        use_quad = bool(p_split) and td_quad > 0

    x3 = x.reshape(bd, hw, cin)                                 # free reshape
    out6_shape = jax.ShapeDtypeStruct((bd, 2, H, 2, W, c2), out_dtype)

    def full_weight_operands(grid_rank):
        if single_dot:
            w_in, b_in = w_folded, bias.reshape(1, cout)
            wshape, bshape = (cin, cout), (1, cout)
            wzero, bzero = (0, 0), (0, 0)
        else:
            w_in = w_folded.reshape(cin, 4, c2).transpose(1, 0, 2)   # (4, Cin, C2)
            b_in = bias.reshape(4, 1, c2)
            wshape, bshape = (4, cin, c2), (4, 1, c2)
            wzero, bzero = (0, 0, 0), (0, 0, 0)
        if grid_rank == 1:
            wmap, bmap = (lambda i: wzero), (lambda i: bzero)
        else:
            wmap, bmap = (lambda i, j: wzero), (lambda i, j: bzero)
        return w_in, b_in, _invariant_spec(wshape, wmap), _invariant_spec(bshape, bmap)

    # ---------------- Fused path A: cout-tiled, one quadrant per grid step ----------------
    if use_quad:
        td = td_quad
        w4 = w_folded.reshape(cin, 4, c2).transpose(1, 0, 2)    # (4, Cin, C2)
        b4 = bias.reshape(4, 1, c2)
        out6 = pl.pallas_call(
            _expand_quadrant_kernel,
            out_shape=out6_shape,
            grid=(bd // td, 4),
            in_specs=[
                pl.BlockSpec((td, hw, cin), lambda i, p: (i, 0, 0)),
                pl.BlockSpec((1, cin, c2), lambda i, p: (p, 0, 0)),
                pl.BlockSpec((1, 1, c2), lambda i, p: (p, 0, 0)),
            ],
            out_specs=pl.BlockSpec((td, 1, H, 1, W, c2),
                                   lambda i, p: (i, p // 2, 0, p % 2, 0, 0)),
            compiler_params=compiler(("parallel", "arbitrary")),
        )(x3, w4, b4)
        return out6.reshape(B, 2 * D, 2 * H, 2 * W, dim)        # pure reshape

    # ---------------- Fused path B: TD whole planes per grid step ----------------
    if td_full > 0:
        td = td_full
        w_in, b_in, w_spec, b_spec = full_weight_operands(grid_rank=1)
        out6 = pl.pallas_call(
            functools.partial(_expand_kernel, single_dot=single_dot),
            out_shape=out6_shape,
            grid=(bd // td,),
            in_specs=[pl.BlockSpec((td, hw, cin), lambda i: (i, 0, 0)), w_spec, b_spec],
            out_specs=pl.BlockSpec((td, 2, H, 2, W, c2),
                                   lambda i: (i, 0, 0, 0, 0, 0)),
            compiler_params=compiler(("parallel",)),
        )(x3, w_in, b_in)
        return out6.reshape(B, 2 * D, 2 * H, 2 * W, dim)        # pure reshape

    # ---------------- Fused path C: a single plane is too big -> split its H rows ----------------
    th = 0
    for cand in range(1, H + 1):
        if H % cand == 0 and cand * W <= tok_full and (cand * W) % sub == 0:
            th = cand
    if th > 0:
        w_in, b_in, w_spec, b_spec = full_weight_operands(grid_rank=2)
        out6 = pl.pallas_call(
            functools.partial(_expand_kernel, single_dot=single_dot),
            out_shape=out6_shape,
            grid=(bd, H // th),
            in_specs=[pl.BlockSpec((1, th * W, cin), lambda i, j: (i, j, 0)),
                      w_spec, b_spec],
            out_specs=pl.BlockSpec((1, 2, th, 2, W, c2),
                                   lambda i, j: (i, 0, j, 0, 0, 0)),
            compiler_params=compiler(("parallel", "parallel")),
        )(x3, w_in, b_in)
        return out6.reshape(B, 2 * D, 2 * H, 2 * W, dim)        # pure reshape

    # ---------------- Fallback: flat tokens + XLA pixel-shuffle ----------------
    # TODO(synk): the extreme corner (weight alone near VMEM *and* a single plane larger
    # than VMEM) is not cout-tiled here; it falls through with the full weight resident.
    n = bd * hw
    max_tok_flat = max(sub, tok_full)
    tn, n_pad = 0, 0
    for cand in range(min(max_tok_flat, n), 0, -1):   # prefer a tile that divides N
        if cand % sub == 0 and n % cand == 0:
            tn = cand
            break
    if tn == 0:
        tn = min(-(-n // sub) * sub, max(sub, (max_tok_flat // sub) * sub))
        n_pad = (-n) % tn
    x_flat = x.reshape(n, cin)
    if n_pad:
        x_flat = jnp.pad(x_flat, ((0, n_pad), (0, 0)))          # last resort only
    n_padded = x_flat.shape[0]

    out_flat = pl.pallas_call(
        _flat_kernel,
        out_shape=jax.ShapeDtypeStruct((n_padded, cout), out_dtype),
        grid=(n_padded // tn,),
        in_specs=[
            pl.BlockSpec((tn, cin), lambda i: (i, 0)),
            _invariant_spec((cin, cout), lambda i: (0, 0)),
            _invariant_spec((1, cout), lambda i: (0, 0)),
        ],
        out_specs=pl.BlockSpec((tn, cout), lambda i: (i, 0)),
        compiler_params=compiler(("parallel",)),
    )(x_flat, w_folded, bias.reshape(1, cout))

    z = out_flat[:n].reshape(B, D, H, W, 2, 2, 2, dim)
    z = jnp.transpose(z, (0, 1, 4, 2, 5, 3, 6, 7))
    return z.reshape(B, 2 * D, 2 * H, 2 * W, dim)


# --------------------------------------------------------------------------- reference


def _reference(x, gamma, beta, w_t):
    # Pure-JAX f32 reference of the module's math.
    B, D, H, W, cin = x.shape
    dim = cin // 2
    xn = _layernorm_f32(x.astype(jnp.float32))
    y = xn * gamma + beta
    z = jnp.einsum("bdhwc,ce->bdhwe", y, w_t.astype(jnp.float32),
                   precision=jax.lax.Precision.HIGHEST)
    z = z.reshape(B, D, H, W, 2, 2, 2, dim)
    z = jnp.transpose(z, (0, 1, 4, 2, 5, 3, 6, 7))
    return z.reshape(B, 2 * D, 2 * H, 2 * W, dim)


if __name__ == "__main__":
    # Pre-warm the hardware queries / Buffered(1) probe outside any trace.
    _vmem_caps()
    _single_buffer_ok()

    key = jax.random.PRNGKey(0)
    k1, k2, k3, kw, kg, kb, kw2, kg2, kb2 = jax.random.split(key, 9)

    def make_params(dim, kw_, kg_, kb_):
        cin, cout = 2 * dim, 8 * dim
        # nn.Linear(2*dim, 8*dim, bias=False).weight is (Cout, Cin); pass its transpose.
        w = jax.random.normal(kw_, (cout, cin), dtype=jnp.float32) * 0.05
        gamma = 1.0 + 0.1 * jax.random.normal(kg_, (cin,), dtype=jnp.float32)
        beta = 0.1 * jax.random.normal(kb_, (cin,), dtype=jnp.float32)
        return w.T, gamma, beta

    def check(x, w_t, gamma, beta, atol=2e-2, rtol=2e-2, **kw_):
        out = jax.block_until_ready(patch_expanding(x, gamma, beta, w_t, **kw_))
        ref = jax.block_until_ready(_reference(x, gamma, beta, w_t))
        assert out.shape == ref.shape, (out.shape, ref.shape)
        out_f = out.astype(jnp.float32)
        err = float(jnp.max(jnp.abs(out_f - ref)))
        assert jnp.allclose(out_f, ref, atol=atol, rtol=rtol), err
        return out

    w8, g8, b8 = make_params(8, kw, kg, kb)        # c2=16  -> per-quadrant dots
    w64, g64, b64 = make_params(64, kw2, kg2, kb2)  # c2=128 -> single full-cout dot

    # 1) Fused multi-plane path, per-quadrant dots (c2 not a multiple of 128).
    x1 = jax.random.normal(k1, (2, 4, 8, 8, 16), dtype=jnp.float32)
    o1 = check(x1, w8, g8, b8)
    assert o1.shape == (2, 8, 16, 16, 8), o1.shape

    # 2) Fused multi-plane path, single full-cout dot (c2 % 128 == 0).
    x2 = jax.random.normal(k2, (2, 2, 4, 4, 128), dtype=jnp.float32)
    o2 = check(x2, w64, g64, b64)
    assert o2.shape == (2, 4, 8, 8, 64), o2.shape

    # 3) Forced cout-tiled (quadrant-per-step) path -- the big-weight guard.
    check(x1, w8, g8, b8, p_split=True)

    # 4) H-row-split path (a single plane exceeds the forced token budget).
    check(x1[:1, :2], w8, g8, b8, tile_tokens=32)

    # 5) Relaxed gate: odd H / unaligned W now takes the fused path by default...
    x3 = jax.random.normal(k3, (1, 2, 3, 6, 16), dtype=jnp.float32)
    o3 = check(x3, w8, g8, b8)
    assert o3.shape == (1, 4, 6, 12, 8), o3.shape
    # ...and the flat fallback still works when forced.
    check(x3, w8, g8, b8, tile_tokens=8)

    # 6) Optional bandwidth saver: bf16 output.
    check(x1, w8, g8, b8, out_dtype=jnp.bfloat16, atol=3e-2, rtol=3e-2)

    print("KERNEL_OK")
</pallas_src>

<mosaic_0001>
module attributes {stable_mosaic.version = 11 : i64} {
  func.func @_expand_kernel(%arg0: i32, %arg1: memref<4x64x16xf32, #tpu.memory_space<vmem>>, %arg2: memref<4x16x16xbf16, #tpu.memory_space<vmem>>, %arg3: memref<4x1x16xf32, #tpu.memory_space<vmem>>, %arg4: memref<4x2x8x2x8x16xf32, #tpu.memory_space<vmem>>) attributes {dimension_semantics = [#tpu.dimension_semantics<parallel>], iteration_bounds = array<i64: 2>, scalar_prefetch = 0 : i64, scratch_operands = 0 : i64, tpu.core_type = #tpu.core_type<tc>, window_params = [{transform_indices = @transform_0, window_bounds = array<i64: 4, 64, 16>}, {pipeline_mode = #tpu.pipeline_mode<synchronous>, transform_indices = @transform_1, window_bounds = array<i64: 4, 16, 16>}, {pipeline_mode = #tpu.pipeline_mode<synchronous>, transform_indices = @transform_2, window_bounds = array<i64: 4, 1, 16>}, {transform_indices = @transform_3, window_bounds = array<i64: 4, 2, 8, 2, 8, 16>}]} {
    %c0 = arith.constant 0 : index
    %c0_0 = arith.constant 0 : index
    %c0_1 = arith.constant 0 : index
    %0 = vector.load %arg1[%c0, %c0_0, %c0_1] : memref<4x64x16xf32, #tpu.memory_space<vmem>>, vector<4x64x16xf32>
    %1 = vector.shape_cast %0 : vector<4x64x16xf32> to vector<256x16xf32>
    %cst = arith.constant dense<0.000000e+00> : vector<256xf32>
    %2 = vector.multi_reduction <add>, %1, %cst [1] : vector<256x16xf32> to vector<256xf32>
    %3 = vector.shape_cast %2 : vector<256xf32> to vector<256x1xf32>
    %cst_2 = arith.constant 1.600000e+01 : f32
    %4 = vector.broadcast %cst_2 : f32 to vector<256x1xf32>
    %5 = arith.divf %3, %4 : vector<256x1xf32>
    %6 = vector.broadcast %5 : vector<256x1xf32> to vector<256x16xf32>
    %7 = arith.subf %1, %6 : vector<256x16xf32>
    %8 = arith.mulf %7, %7 : vector<256x16xf32>
    %cst_3 = arith.constant dense<0.000000e+00> : vector<256xf32>
    %9 = vector.multi_reduction <add>, %8, %cst_3 [1] : vector<256x16xf32> to vector<256xf32>
    %10 = vector.shape_cast %9 : vector<256xf32> to vector<256x1xf32>
    %cst_4 = arith.constant 1.600000e+01 : f32
    %11 = vector.broadcast %cst_4 : f32 to vector<256x1xf32>
    %12 = arith.divf %10, %11 : vector<256x1xf32>
    %cst_5 = arith.constant 9.99999974E-6 : f32
    %13 = vector.broadcast %cst_5 : f32 to vector<256x1xf32>
    %14 = arith.addf %12, %13 : vector<256x1xf32>
    %15 = math.rsqrt %14 : vector<256x1xf32>
    %16 = vector.broadcast %15 : vector<256x1xf32> to vector<256x16xf32>
    %17 = arith.mulf %7, %16 : vector<256x16xf32>
    %18 = arith.truncf %17 : vector<256x16xf32> to vector<256x16xbf16>
    %c0_6 = arith.constant 0 : index
    %c0_7 = arith.constant 0 : index
    %c0_8 = arith.constant 0 : index
    %19 = vector.load %arg2[%c0_6, %c0_7, %c0_8] : memref<4x16x16xbf16, #tpu.memory_space<vmem>>, vector<1x16x16xbf16>
    %20 = vector.shape_cast %19 : vector<1x16x16xbf16> to vector<16x16xbf16>
    %cst_9 = arith.constant dense<0.000000e+00> : vector<256x16xf32>
    %21 = tpu.matmul %18, %20, %cst_9 {dimension_numbers = #tpu.dot_dimension_numbers<[1], [0], [0], [1], [0, 0, 1, 1], [], []>} : vector<256x16xbf16>, vector<16x16xbf16>, vector<256x16xf32> -> vector<256x16xf32>
    %c0_10 = arith.constant 0 : index
    %c0_11 = arith.constant 0 : index
    %c0_12 = arith.constant 0 : index
    %22 = vector.load %arg3[%c0_10, %c0_11, %c0_12] : memref<4x1x16xf32, #tpu.memory_space<vmem>>, vector<1x1x16xf32>
    %23 = vector.shape_cast %22 : vector<1x1x16xf32> to vector<1x16xf32>
    %24 = vector.broadcast %23 : vector<1x16xf32> to vector<256x16xf32>
    %25 = arith.addf %21, %24 : vector<256x16xf32>
    %26 = vector.shape_cast %25 : vector<256x16xf32> to vector<4x8x8x16xf32>
    %c0_13 = arith.constant 0 : index
    %c0_14 = arith.constant 0 : index
    %c0_15 = arith.constant 0 : index
    %c0_16 = arith.constant 0 : index
    %c0_17 = arith.constant 0 : index
    %c0_18 = arith.constant 0 : index
    %27 = vector.load %arg4[%c0_13, %c0_14, %c0_15, %c0_16, %c0_17, %c0_18] : memref<4x2x8x2x8x16xf32, #tpu.memory_space<vmem>>, vector<4x1x8x1x8x16xf32>
    %28 = vector.shape_cast %27 : vector<4x1x8x1x8x16xf32> to vector<4x8x8x16xf32>
    %29 = vector.shape_cast %26 : vector<4x8x8x16xf32> to vector<4x1x8x1x8x16xf32>
    tpu.vector_store %arg4[%c0_13, %c0_14, %c0_15, %c0_16, %c0_17, %c0_18], %29 {strides = array<i32>} : memref<4x2x8x2x8x16xf32, #tpu.memory_space<vmem>>, vector<4x1x8x1x8x16xf32>,
    %c1 = arith.constant 1 : index
    %c0_19 = arith.constant 0 : index
    %c0_20 = arith.constant 0 : index
    %30 = vector.load %arg2[%c1, %c0_19, %c0_20] : memref<4x16x16xbf16, #tpu.memory_space<vmem>>, vector<1x16x16xbf16>
    %31 = vector.shape_cast %30 : vector<1x16x16xbf16> to vector<16x16xbf16>
    %cst_21 = arith.constant dense<0.000000e+00> : vector<256x16xf32>
    %32 = tpu.matmul %18, %31, %cst_21 {dimension_numbers = #tpu.dot_dimension_numbers<[1], [0], [0], [1], [0, 0, 1, 1], [], []>} : vector<256x16xbf16>, vector<16x16xbf16>, vector<256x16xf32> -> vector<256x16xf32>
    %c1_22 = arith.constant 1 : index
    %c0_23 = arith.constant 0 : index
    %c0_24 = arith.constant 0 : index
    %33 = vector.load %arg3[%c1_22, %c0_23, %c0_24] : memref<4x1x16xf32, #tpu.memory_space<vmem>>, vector<1x1x16xf32>
    %34 = vector.shape_cast %33 : vector<1x1x16xf32> to vector<1x16xf32>
    %35 = vector.broadcast %34 : vector<1x16xf32> to vector<256x16xf32>
    %36 = arith.addf %32, %35 : vector<256x16xf32>
    %37 = vector.shape_cast %36 : vector<256x16xf32> to vector<4x8x8x16xf32>
    %c0_25 = arith.constant 0 : index
    %c0_26 = arith.constant 0 : index
    %c0_27 = arith.constant 0 : index
    %c1_28 = arith.constant 1 : index
    %c0_29 = arith.constant 0 : index
    %c0_30 = arith.constant 0 : index
    %38 = vector.load %arg4[%c0_25, %c0_26, %c0_27, %c1_28, %c0_29, %c0_30] : memref<4x2x8x2x8x16xf32, #tpu.memory_space<vmem>>, vector<4x1x8x1x8x16xf32>
    %39 = vector.shape_cast %38 : vector<4x1x8x1x8x16xf32> to vector<4x8x8x16xf32>
    %40 = vector.shape_cast %37 : vector<4x8x8x16xf32> to vector<4x1x8x1x8x16xf32>
    tpu.vector_store %arg4[%c0_25, %c0_26, %c0_27, %c1_28, %c0_29, %c0_30], %40 {strides = array<i32>} : memref<4x2x8x2x8x16xf32, #tpu.memory_space<vmem>>, vector<4x1x8x1x8x16xf32>,
    %c2 = arith.constant 2 : index
    %c0_31 = arith.constant 0 : index
    %c0_32 = arith.constant 0 : index
    %41 = vector.load %arg2[%c2, %c0_31, %c0_32] : memref<4x16x16xbf16, #tpu.memory_space<vmem>>, vector<1x16x16xbf16>
    %42 = vector.shape_cast %41 : vector<1x16x16xbf16> to vector<16x16xbf16>
    %cst_33 = arith.constant dense<0.000000e+00> : vector<256x16xf32>
    %43 = tpu.matmul %18, %42, %cst_33 {dimension_numbers = #tpu.dot_dimension_numbers<[1], [0], [0], [1], [0, 0, 1, 1], [], []>} : vector<256x16xbf16>, vector<16x16xbf16>, vector<256x16xf32> -> vector<256x16xf32>
    %c2_34 = arith.constant 2 : index
    %c0_35 = arith.constant 0 : index
    %c0_36 = arith.constant 0 : index
    %44 = vector.load %arg3[%c2_34, %c0_35, %c0_36] : memref<4x1x16xf32, #tpu.memory_space<vmem>>, vector<1x1x16xf32>
    %45 = vector.shape_cast %44 : vector<1x1x16xf32> to vector<1x16xf32>
    %46 = vector.broadcast %45 : vector<1x16xf32> to vector<256x16xf32>
    %47 = arith.addf %43, %46 : vector<256x16xf32>
    %48 = vector.shape_cast %47 : vector<256x16xf32> to vector<4x8x8x16xf32>
    %c0_37 = arith.constant 0 : index
    %c1_38 = arith.constant 1 : index
    %c0_39 = arith.constant 0 : index
    %c0_40 = arith.constant 0 : index
    %c0_41 = arith.constant 0 : index
    %c0_42 = arith.constant 0 : index
    %49 = vector.load %arg4[%c0_37, %c1_38, %c0_39, %c0_40, %c0_41, %c0_42] : memref<4x2x8x2x8x16xf32, #tpu.memory_space<vmem>>, vector<4x1x8x1x8x16xf32>
    %50 = vector.shape_cast %49 : vector<4x1x8x1x8x16xf32> to vector<4x8x8x16xf32>
    %51 = vector.shape_cast %48 : vector<4x8x8x16xf32> to vector<4x1x8x1x8x16xf32>
    tpu.vector_store %arg4[%c0_37, %c1_38, %c0_39, %c0_40, %c0_41, %c0_42], %51 {strides = array<i32>} : memref<4x2x8x2x8x16xf32, #tpu.memory_space<vmem>>, vector<4x1x8x1x8x16xf32>,
    %c3 = arith.constant 3 : index
    %c0_43 = arith.constant 0 : index
    %c0_44 = arith.constant 0 : index
    %52 = vector.load %arg2[%c3, %c0_43, %c0_44] : memref<4x16x16xbf16, #tpu.memory_space<vmem>>, vector<1x16x16xbf16>
    %53 = vector.shape_cast %52 : vector<1x16x16xbf16> to vector<16x16xbf16>
    %cst_45 = arith.constant dense<0.000000e+00> : vector<256x16xf32>
    %54 = tpu.matmul %18, %53, %cst_45 {dimension_numbers = #tpu.dot_dimension_numbers<[1], [0], [0], [1], [0, 0, 1, 1], [], []>} : vector<256x16xbf16>, vector<16x16xbf16>, vector<256x16xf32> -> vector<256x16xf32>
    %c3_46 = arith.constant 3 : index
    %c0_47 = arith.constant 0 : index
    %c0_48 = arith.constant 0 : index
    %55 = vector.load %arg3[%c3_46, %c0_47, %c0_48] : memref<4x1x16xf32, #tpu.memory_space<vmem>>, vector<1x1x16xf32>
    %56 = vector.shape_cast %55 : vector<1x1x16xf32> to vector<1x16xf32>
    %57 = vector.broadcast %56 : vector<1x16xf32> to vector<256x16xf32>
    %58 = arith.addf %54, %57 : vector<256x16xf32>
    %59 = vector.shape_cast %58 : vector<256x16xf32> to vector<4x8x8x16xf32>
    %c0_49 = arith.constant 0 : index
    %c1_50 = arith.constant 1 : index
    %c0_51 = arith.constant 0 : index
    %c1_52 = arith.constant 1 : index
    %c0_53 = arith.constant 0 : index
    %c0_54 = arith.constant 0 : index
    %60 = vector.load %arg4[%c0_49, %c1_50, %c0_51, %c1_52, %c0_53, %c0_54] : memref<4x2x8x2x8x16xf32, #tpu.memory_space<vmem>>, vector<4x1x8x1x8x16xf32>
    %61 = vector.shape_cast %60 : vector<4x1x8x1x8x16xf32> to vector<4x8x8x16xf32>
    %62 = vector.shape_cast %59 : vector<4x8x8x16xf32> to vector<4x1x8x1x8x16xf32>
    tpu.vector_store %arg4[%c0_49, %c1_50, %c0_51, %c1_52, %c0_53, %c0_54], %62 {strides = array<i32>} : memref<4x2x8x2x8x16xf32, #tpu.memory_space<vmem>>, vector<4x1x8x1x8x16xf32>,
    return
  }
  func.func @transform_0(%arg0: i32) -> (i32, i32, i32) {
    %c0_i32 = arith.constant 0 : i32
    %c0_i32_0 = arith.constant 0 : i32
    %c0_i32_1 = arith.constant 0 : i32
    return %arg0, %c0_i32, %c0_i32_0 : i32, i32, i32
  }
  func.func @transform_1(%arg0: i32) -> (i32, i32, i32) {
    %c0_i32 = arith.constant 0 : i32
    %c0_i32_0 = arith.constant 0 : i32
    %c0_i32_1 = arith.constant 0 : i32
    %c0_i32_2 = arith.constant 0 : i32
    return %c0_i32, %c0_i32_0, %c0_i32_1 : i32, i32, i32
  }
  func.func @transform_2(%arg0: i32) -> (i32, i32, i32) {
    %c0_i32 = arith.constant 0 : i32
    %c0_i32_0 = arith.constant 0 : i32
    %c0_i32_1 = arith.constant 0 : i32
    %c0_i32_2 = arith.constant 0 : i32
    return %c0_i32, %c0_i32_0, %c0_i32_1 : i32, i32, i32
  }
  func.func @transform_3(%arg0: i32) -> (i32, i32, i32, i32, i32, i32) {
    %c0_i32 = arith.constant 0 : i32
    %c0_i32_0 = arith.constant 0 : i32
    %c0_i32_1 = arith.constant 0 : i32
    %c0_i32_2 = arith.constant 0 : i32
    %c0_i32_3 = arith.constant 0 : i32
    %c0_i32_4 = arith.constant 0 : i32
    return %arg0, %c0_i32, %c0_i32_0, %c0_i32_1, %c0_i32_2, %c0_i32_3 : i32, i32, i32, i32, i32, i32
  }
}

</mosaic_0001>

<llo_original>
// kernel: patch_expanding.1
$region0: #{patch_expanding.1}
  #allocation0 [shape = 'u32[]', space=smem, size = 0x4, offset = 0x4, fixed_abs, tag = 'smem constant byte address 0x4 - core index']
  #allocation1 [shape = 'u32[72,128]{1,0:T(1,128)}', space=vmem, size = 0x9000, scoped, tag = 'internal scratch']
  %s0 = inlined_call_operand.hbm [shape: f32[8,64,16], index: 0, kind: input, shape index: {}]
  %s1 = inlined_call_operand.vmem [shape: bf16[4,16,16], index: 1, kind: input, shape index: {}]
  %s2 = inlined_call_operand.vmem [shape: f32[4,1,16], index: 2, kind: input, shape index: {}]
  %s3 = inlined_call_operand.vmem [shape: f32[8,2,8,2,8,16], index: 3, kind: output, shape index: {}]
  %s4 = sld [smem:[#allocation0]]
  $region49: #{patch_expanding.1} parent=0
    _
  %s6 = ssub.s32 1, %s4
  %s7 = scalar_select 0, %s6, %s4
  $region1: #{patch_expanding.1} parent=0
    #allocation2 [shape = 'u8[262144]{0}', space=vmem, size = 0x40000, scoped, tag = 'input window, operand 0']
    #allocation3 [shape = 's32[2]{0}', space=sflag, size = 0x8, scoped, tag = 'scoped memory for patch_expanding.1']
    %8 = vsyncpa [#allocation3], 0
    %s9 = scalar_lea.sflag [#allocation3], 1
    %10 = vsyncpa %s9, 0
    loop: start=0, step=1, limit=4
    $region2: #{patch_expanding.1} parent=1 // loop_pre_header
      _
    $region3: #{patch_expanding.1} parent=1 // loop_header
      %s12 = sphi 0, %s16
      %p13 = scmp.ge.s32.totalorder %s12, 4
      %s22 = sphi 0, %s24
      %s25 = sphi 0, %s22
      %s26 = sphi 0, %s25
      %s42 = sphi 0, %s26
      %s46 = sphi 0, %s46
      %s48 = sphi 0, %s46
      %s49 = sphi 0, %s48
      %s63 = sphi 0, %s49
      %s67 = sphi 0, %s67
      %s69 = sphi 0, %s67
      %s70 = sphi 0, %s69
      %s84 = sphi 0, %s70
      %s90 = sphi 0, %s92
      %s93 = sphi 0, %s90
      %s94 = sphi 0, %s93
      %s110 = sphi 0, %s94
    $region4: #{patch_expanding.1} parent=1 // loop_header_branch
      %15 = sbr.rel (%p13) target = $region8
    $region5: #{patch_expanding.1} parent=1 // loop_body
      %s17 = ssub.s32 %s12, 1
      %s18 = ssub.s32 %s12, 2
      %s19 = sadd.s32 %s12, 1
      %s20 = ssub.s32 %s12, %s19
      %p21 = scmp.eq.s32.totalorder %s20, 0
      %s23 = sadd.s32 %s22, 1
      %s24 = scalar_select %p21, %s22, %s23
      %p27 = pneg %p21
      %p28 = scmp.eq.s32.totalorder %s12, 1
      %p29 = por %p27, %p28
      %p30 = scmp.ne.s32.totalorder %s22, %s25
      %p31 = scmp.eq.s32.totalorder %s12, 0
      %p32 = por %p30, %p31
      %p33 = scmp.ne.s32.totalorder %s22, %s25
      %p34 = scmp.eq.s32.totalorder %s17, 1
      %p35 = por %p33, %p34
      %p36 = scmp.ne.s32.totalorder %s25, %s26
      %p37 = scmp.eq.s32.totalorder %s17, 0
      %p38 = por %p36, %p37
      %p39 = scmp.ne.s32.totalorder %s25, %s26
      %p40 = scmp.eq.s32.totalorder %s18, 1
      %p41 = por %p39, %p40
      %p43 = scmp.ne.s32.totalorder %s26, %s42
      %p44 = scmp.eq.s32.totalorder %s18, 0
      %p45 = por %p43, %p44
      %s47 = sadd.s32 %s46, 1
      %p50 = scmp.eq.s32.totalorder %s12, 1
      %p51 = scmp.ne.s32.totalorder %s46, %s48
      %p52 = scmp.eq.s32.totalorder %s12, 0
      %p53 = por %p51, %p52
      %p54 = scmp.ne.s32.totalorder %s46, %s48
      %p55 = scmp.eq.s32.totalorder %s17, 1
      %p56 = por %p54, %p55
      %p57 = scmp.ne.s32.totalorder %s48, %s49
      %p58 = scmp.eq.s32.totalorder %s17, 0
      %p59 = por %p57, %p58
      %p60 = scmp.ne.s32.totalorder %s48, %s49
      %p61 = scmp.eq.s32.totalorder %s18, 1
      %p62 = por %p60, %p61
      %p64 = scmp.ne.s32.totalorder %s49, %s63
      %p65 = scmp.eq.s32.totalorder %s18, 0
      %p66 = por %p64, %p65
      %s68 = sadd.s32 %s67, 1
      %p71 = scmp.eq.s32.totalorder %s12, 1
      %p72 = scmp.ne.s32.totalorder %s67, %s69
      %p73 = scmp.eq.s32.totalorder %s12, 0
      %p74 = por %p72, %p73
      %p75 = scmp.ne.s32.totalorder %s67, %s69
      %p76 = scmp.eq.s32.totalorder %s17, 1
      %p77 = por %p75, %p76
      %p78 = scmp.ne.s32.totalorder %s69, %s70
      %p79 = scmp.eq.s32.totalorder %s17, 0
      %p80 = por %p78, %p79
      %p81 = scmp.ne.s32.totalorder %s69, %s70
      %p82 = scmp.eq.s32.totalorder %s18, 1
      %p83 = por %p81, %p82
      %p85 = scmp.ne.s32.totalorder %s70, %s84
      %p86 = scmp.eq.s32.totalorder %s18, 0
      %p87 = por %p85, %p86
      %s88 = ssub.s32 %s12, %s19
      %p89 = scmp.eq.s32.totalorder %s88, 0
      %s91 = sadd.s32 %s90, 1
      %s92 = scalar_select %p89, %s90, %s91
      %p95 = pneg %p89
      %p96 = scmp.eq.s32.totalorder %s12, 1
      %p97 = por %p95, %p96
      %p98 = scmp.ne.s32.totalorder %s90, %s93
      %p99 = scmp.eq.s32.totalorder %s12, 0
      %p100 = por %p98, %p99
      %p101 = scmp.ne.s32.totalorder %s90, %s93
      %p102 = scmp.eq.s32.totalorder %s17, 1
      %p103 = por %p101, %p102
      %p104 = scmp.ne.s32.totalorder %s93, %s94
      %p105 = scmp.eq.s32.totalorder %s17, 0
      %p106 = por %p104, %p105
      %p107 = scmp.ne.s32.totalorder %s93, %s94
      %p108 = scmp.eq.s32.totalorder %s18, 1
      %p109 = por %p107, %p108
      %p111 = scmp.ne.s32.totalorder %s94, %s110
      %p112 = scmp.eq.s32.totalorder %s18, 0
      %p113 = por %p111, %p112
      %p114 = scmp.le.s32.totalorder 1, %s12
      %p115 = scmp.lt.s32.totalorder %s12, 3
      %p116 = pnand %p114, %p115
      %p117 = pneg %p116
      // Predicated region
      $region9: #{patch_expanding.1} parent=5 // pred_check
        _
      $region10: #{patch_expanding.1} parent=5 // pred_check_branch
        %119 = sbr.rel (%p116) target = $region12
      $region11: #{patch_expanding.1} parent=5 // pred_region
        %s120 = ssub.s32 %s12, 1
        // Predicated region
        $region13: #{patch_expanding.1} parent=11 // pred_check
          %p121 = pneg %p59
        $region14: #{patch_expanding.1} parent=11 // pred_check_branch
          %123 = sbr.rel (%p121) target = $region16
        $region15: #{patch_expanding.1} parent=11 // pred_region
          _
        $region16: #{patch_expanding.1} parent=11 // pred_fallthru
          _
        // Predicated region
        $region17: #{patch_expanding.1} parent=11 // pred_check
          %p124 = pneg %p80
        $region18: #{patch_expanding.1} parent=11 // pred_check_branch
          %126 = sbr.rel (%p124) target = $region20
        $region19: #{patch_expanding.1} parent=11 // pred_region
          _
        $region20: #{patch_expanding.1} parent=11 // pred_fallthru
          _
      $region12: #{patch_expanding.1} parent=5 // pred_fallthru
        _
      %p127 = scmp.lt.s32.totalorder %s12, 2
      // Predicated region
      $region21: #{patch_expanding.1} parent=5 // pred_check
        %p128 = pneg %p127
      $region22: #{patch_expanding.1} parent=5 // pred_check_branch
        %130 = sbr.rel (%p128) target = $region24
      $region23: #{patch_expanding.1} parent=5 // pred_region
        // Predicated region
        $region25: #{patch_expanding.1} parent=23 // pred_check
          %p131 = pneg %p32
        $region26: #{patch_expanding.1} parent=23 // pred_check_branch
          %133 = sbr.rel (%p131) target = $region28
        $region27: #{patch_expanding.1} parent=23 // pred_region
          %s134 = sand.u32 %s22, 1
          %s135 = scalar_lea.sflag [#allocation3], %s134
          %s136 = sand.u32 %s22, 1
          %s137 = smul.addr %s136, 256
          %s138 = scalar_lea.vmem [#allocation2], %s137
          %s139 = smul.u32 4, %s12
          %141 = vsyncadd %s135, 0
          %s142 = smul.addr %s139, 8
          %s143 = smul.addr %s142, 8
          %s144 = scalar_lea.hbm %s0, %s143
          %s145 = sshll.u32 %s144, 4
          %s146 = int_to_ptr.hbm [resolvable:$true] %s145
          %s147 = sshll.u32 %s138, 4
          %s148 = int_to_ptr.vmem [resolvable:$true] %s147
          %153 = dma.hbm_to_vmem [thread:$0]  %s146, 4096, %s148, %s135, 128, 128, 8
        $region28: #{patch_expanding.1} parent=23 // pred_fallthru
          _
      $region24: #{patch_expanding.1} parent=5 // pred_fallthru
        _
      %p154 = scmp.le.s32.totalorder 1, %s12
      %p155 = scmp.lt.s32.totalorder %s12, 3
      %p156 = pnand %p154, %p155
      %p157 = pneg %p156
      // Predicated region
      $region29: #{patch_expanding.1} parent=5 // pred_check
        _
      $region30: #{patch_expanding.1} parent=5 // pred_check_branch
        %159 = sbr.rel (%p156) target = $region32
      $region31: #{patch_expanding.1} parent=5 // pred_region
        %s160 = ssub.s32 %s12, 1
        %s161 = sand.u32 %s25, 1
        %s162 = scalar_lea.sflag [#allocation3], %s161
        %s163 = sand.u32 %s25, 1
        %s164 = smul.addr %s163, 256
        %s165 = scalar_lea.vmem [#allocation2], %s164
        // Predicated region
        $region33: #{patch_expanding.1} parent=31 // pred_check
          %p166 = pneg %p38
        $region34: #{patch_expanding.1} parent=31 // pred_check_branch
          %168 = sbr.rel (%p166) target = $region36
        $region35: #{patch_expanding.1} parent=31 // pred_region
          %170 = dma.done %s162, 4096
        $region36: #{patch_expanding.1} parent=31 // pred_fallthru
          _
        %s171 = sand.u32 %s25, 1
        %s172 = scalar_lea.sflag [#allocation3], %s171
        %s173 = sand.u32 %s25, 1
        %s174 = smul.addr %s173, 256
        %s175 = scalar_lea.vmem [#allocation2], %s174
        %p176 = pneg %p38
        %p177 = pneg %p35
        %p178 = pneg %p59
        %p179 = pneg %p56
        %p180 = pneg %p80
        %p181 = pneg %p77
        %p182 = pneg %p106
        %p183 = pneg %p103
        %s184 = smul.u32 4, %s17
        %p185 = scmp.lt.s32.totalorder %s184, 7
        %s186 = scalar_select %p185, %s184, 7
        %s187 = smul.addr %s186, 32
        %s188 = smul.addr %s187, 8
        %s189 = scalar_lea.vmem %s3, %s188
        %s190 = smul.u32 4, %s17
        %s191 = smul.u32 4, %s17
        %p192 = scmp.lt.s32.totalorder %s191, 7
        %s193 = scalar_select %p192, %s191, 7
        %s194 = smul.addr %s193, 32
        %s195 = smul.addr %s194, 8
        %s196 = scalar_lea.vmem %s3, %s195
        %s197 = smul.u32 4, %s17
        %v199 = vld [vmem:[%s165] sm:$0xff]
        %v200 = vld [vmem:[%s165 + $0x8] sm:$0xff]
        %v201 = vld [vmem:[%s165 + $0x10] sm:$0xff]
        %v202 = vld [vmem:[%s165 + $0x18] sm:$0xff]
        %v203 = vld [vmem:[%s165 + $0x20] sm:$0xff]
        %v204 = vld [vmem:[%s165 + $0x28] sm:$0xff]
        %v205 = vld [vmem:[%s165 + $0x30] sm:$0xff]
        %v206 = vld [vmem:[%s165 + $0x38] sm:$0xff]
        %v207 = vld [vmem:[%s165 + $0x40] sm:$0xff]
        %v208 = vld [vmem:[%s165 + $0x48] sm:$0xff]
        %v209 = vld [vmem:[%s165 + $0x50] sm:$0xff]
        %v210 = vld [vmem:[%s165 + $0x58] sm:$0xff]
        %v211 = vld [vmem:[%s165 + $0x60] sm:$0xff]
        %v212 = vld [vmem:[%s165 + $0x68] sm:$0xff]
        %v213 = vld [vmem:[%s165 + $0x70] sm:$0xff]
        %v214 = vld [vmem:[%s165 + $0x78] sm:$0xff]
        %v215 = vld [vmem:[%s165 + $0x80] sm:$0xff]
        %v216 = vld [vmem:[%s165 + $0x88] sm:$0xff]
        %v217 = vld [vmem:[%s165 + $0x90] sm:$0xff]
        %v218 = vld [vmem:[%s165 + $0x98] sm:$0xff]
        %v219 = vld [vmem:[%s165 + $0xa0] sm:$0xff]
        %v220 = vld [vmem:[%s165 + $0xa8] sm:$0xff]
        %v221 = vld [vmem:[%s165 + $0xb0] sm:$0xff]
        %v222 = vld [vmem:[%s165 + $0xb8] sm:$0xff]
        %v223 = vld [vmem:[%s165 + $0xc0] sm:$0xff]
        %v224 = vld [vmem:[%s165 + $0xc8] sm:$0xff]
        %v225 = vld [vmem:[%s165 + $0xd0] sm:$0xff]
        %v226 = vld [vmem:[%s165 + $0xd8] sm:$0xff]
        %v227 = vld [vmem:[%s165 + $0xe0] sm:$0xff]
        %v228 = vld [vmem:[%s165 + $0xe8] sm:$0xff]
        %v229 = vld [vmem:[%s165 + $0xf0] sm:$0xff]
        %v230 = vld [vmem:[%s165 + $0xf8] sm:$0xff]
        %vm231 = vcmask 130048
        %v232 = vsel %vm231, %v199, 0.0
        %233 = vadd.xlane.f32.xlu0 %v232
        %v234 = vpop.xlane.xlu0 %233
        %v235 = vsel %vm231, %v200, 0.0
        %236 = vadd.xlane.f32.xlu0 %v235
        %v237 = vpop.xlane.xlu0 %236
        %v238 = vsel %vm231, %v201, 0.0
        %239 = vadd.xlane.f32.xlu0 %v238
        %v240 = vpop.xlane.xlu0 %239
        %v241 = vsel %vm231, %v202, 0.0
        %242 = vadd.xlane.f32.xlu0 %v241
        %v243 = vpop.xlane.xlu0 %242
        %v244 = vsel %vm231, %v203, 0.0
        %245 = vadd.xlane.f32.xlu0 %v244
        %v246 = vpop.xlane.xlu0 %245
        %v247 = vsel %vm231, %v204, 0.0
        %248 = vadd.xlane.f32.xlu0 %v247
        %v249 = vpop.xlane.xlu0 %248
        %v250 = vsel %vm231, %v205, 0.0
        %251 = vadd.xlane.f32.xlu0 %v250
        %v252 = vpop.xlane.xlu0 %251
        %v253 = vsel %vm231, %v206, 0.0
        %254 = vadd.xlane.f32.xlu0 %v253
        %v255 = vpop.xlane.xlu0 %254
        %v256 = vsel %vm231, %v207, 0.0
        %257 = vadd.xlane.f32.xlu0 %v256
        %v258 = vpop.xlane.xlu0 %257
        %v259 = vsel %vm231, %v208, 0.0
        %260 = vadd.xlane.f32.xlu0 %v259
        %v261 = vpop.xlane.xlu0 %260
        %v262 = vsel %vm231, %v209, 0.0
        %263 = vadd.xlane.f32.xlu0 %v262
        %v264 = vpop.xlane.xlu0 %263
        %v265 = vsel %vm231, %v210, 0.0
        %266 = vadd.xlane.f32.xlu0 %v265
        %v267 = vpop.xlane.xlu0 %266
        %v268 = vsel %vm231, %v211, 0.0
        %269 = vadd.xlane.f32.xlu0 %v268
        %v270 = vpop.xlane.xlu0 %269
        %v271 = vsel %vm231, %v212, 0.0
        %272 = vadd.xlane.f32.xlu0 %v271
        %v273 = vpop.xlane.xlu0 %272
        %v274 = vsel %vm231, %v213, 0.0
        %275 = vadd.xlane.f32.xlu0 %v274
        %v276 = vpop.xlane.xlu0 %275
        %v277 = vsel %vm231, %v214, 0.0
        %278 = vadd.xlane.f32.xlu0 %v277
        %v279 = vpop.xlane.xlu0 %278
        %v280 = vsel %vm231, %v215, 0.0
        %281 = vadd.xlane.f32.xlu0 %v280
        %v282 = vpop.xlane.xlu0 %281
        %v283 = vsel %vm231, %v216, 0.0
        %284 = vadd.xlane.f32.xlu0 %v283
        %v285 = vpop.xlane.xlu0 %284
        %v286 = vsel %vm231, %v217, 0.0
        %287 = vadd.xlane.f32.xlu0 %v286
        %v288 = vpop.xlane.xlu0 %287
        %v289 = vsel %vm231, %v218, 0.0
        %290 = vadd.xlane.f32.xlu0 %v289
        %v291 = vpop.xlane.xlu0 %290
        %v292 = vsel %vm231, %v219, 0.0
        %293 = vadd.xlane.f32.xlu0 %v292
        %v294 = vpop.xlane.xlu0 %293
        %v295 = vsel %vm231, %v220, 0.0
        %296 = vadd.xlane.f32.xlu0 %v295
        %v297 = vpop.xlane.xlu0 %296
        %v298 = vsel %vm231, %v221, 0.0
        %299 = vadd.xlane.f32.xlu0 %v298
        %v300 = vpop.xlane.xlu0 %299
        %v301 = vsel %vm231, %v222, 0.0
        %302 = vadd.xlane.f32.xlu0 %v301
        %v303 = vpop.xlane.xlu0 %302
        %v304 = vsel %vm231, %v223, 0.0
        %305 = vadd.xlane.f32.xlu0 %v304
        %v306 = vpop.xlane.xlu0 %305
        %v307 = vsel %vm231, %v224, 0.0
        %308 = vadd.xlane.f32.xlu0 %v307
        %v309 = vpop.xlane.xlu0 %308
        %v310 = vsel %vm231, %v225, 0.0
        %311 = vadd.xlane.f32.xlu0 %v310
        %v312 = vpop.xlane.xlu0 %311
        %v313 = vsel %vm231, %v226, 0.0
        %314 = vadd.xlane.f32.xlu0 %v313
        %v315 = vpop.xlane.xlu0 %314
        %v316 = vsel %vm231, %v227, 0.0
        %317 = vadd.xlane.f32.xlu0 %v316
        %v318 = vpop.xlane.xlu0 %317
        %v319 = vsel %vm231, %v228, 0.0
        %320 = vadd.xlane.f32.xlu0 %v319
        %v321 = vpop.xlane.xlu0 %320
        %v322 = vsel %vm231, %v229, 0.0
        %323 = vadd.xlane.f32.xlu0 %v322
        %v324 = vpop.xlane.xlu0 %323
        %v325 = vsel %vm231, %v230, 0.0
        %326 = vadd.xlane.f32.xlu0 %v325
        %v327 = vpop.xlane.xlu0 %326
        %v328 = vrcp.pop 16.0
        %v329 = vmul.f32 16.0, %v328
        %v330 = vsub.f32 1.0, %v329
        %v331 = vmul.f32 %v328, %v330
        %v332 = vadd.f32 %v328, %v331
        %vm333 = vweird.f32 %v328
        %v334 = vsel %vm333, %v328, %v332
        %v335 = vmul.f32 %v234, %v334
        %v336 = vmul.f32 %v237, %v334
        %v337 = vmul.f32 %v240, %v334
        %v338 = vmul.f32 %v243, %v334
        %v339 = vmul.f32 %v246, %v334
        %v340 = vmul.f32 %v249, %v334
        %v341 = vmul.f32 %v252, %v334
        %v342 = vmul.f32 %v255, %v334
        %v343 = vmul.f32 %v258, %v334
        %v344 = vmul.f32 %v261, %v334
        %v345 = vmul.f32 %v264, %v334
        %v346 = vmul.f32 %v267, %v334
        %v347 = vmul.f32 %v270, %v334
        %v348 = vmul.f32 %v273, %v334
        %v349 = vmul.f32 %v276, %v334
        %v350 = vmul.f32 %v279, %v334
        %v351 = vmul.f32 %v282, %v334
        %v352 = vmul.f32 %v285, %v334
        %v353 = vmul.f32 %v288, %v334
        %v354 = vmul.f32 %v291, %v334
        %v355 = vmul.f32 %v294, %v334
        %v356 = vmul.f32 %v297, %v334
        %v357 = vmul.f32 %v300, %v334
        %v358 = vmul.f32 %v303, %v334
        %v359 = vmul.f32 %v306, %v334
        %v360 = vmul.f32 %v309, %v334
        %v361 = vmul.f32 %v312, %v334
        %v362 = vmul.f32 %v315, %v334
        %v363 = vmul.f32 %v318, %v334
        %v364 = vmul.f32 %v321, %v334
        %v365 = vmul.f32 %v324, %v334
        %v366 = vmul.f32 %v327, %v334
        %v367 = vsub.f32 %v199, %v335
        %v368 = vsub.f32 %v200, %v336
        %v369 = vsub.f32 %v201, %v337
        %v370 = vsub.f32 %v202, %v338
        %v371 = vsub.f32 %v203, %v339
        %v372 = vsub.f32 %v204, %v340
        %v373 = vsub.f32 %v205, %v341
        %v374 = vsub.f32 %v206, %v342
        %v375 = vsub.f32 %v207, %v343
        %v376 = vsub.f32 %v208, %v344
        %v377 = vsub.f32 %v209, %v345
        %v378 = vsub.f32 %v210, %v346
        %v379 = vsub.f32 %v211, %v347
        %v380 = vsub.f32 %v212, %v348
        %v381 = vsub.f32 %v213, %v349
        %v382 = vsub.f32 %v214, %v350
        %v383 = vsub.f32 %v215, %v351
        %v384 = vsub.f32 %v216, %v352
        %v385 = vsub.f32 %v217, %v353
        %v386 = vsub.f32 %v218, %v354
        %v387 = vsub.f32 %v219, %v355
        %v388 = vsub.f32 %v220, %v356
        %v389 = vsub.f32 %v221, %v357
        %v390 = vsub.f32 %v222, %v358
        %v391 = vsub.f32 %v223, %v359
        %v392 = vsub.f32 %v224, %v360
        %v393 = vsub.f32 %v225, %v361
        %v394 = vsub.f32 %v226, %v362
        %v395 = vsub.f32 %v227, %v363
        %v396 = vsub.f32 %v228, %v364
        %v397 = vsub.f32 %v229, %v365
        %v398 = vsub.f32 %v230, %v366
        %v399 = vmul.f32 %v367, %v367
        %v400 = vmul.f32 %v368, %v368
        %v401 = vmul.f32 %v369, %v369
        %v402 = vmul.f32 %v370, %v370
        %v403 = vmul.f32 %v371, %v371
        %v404 = vmul.f32 %v372, %v372
        %v405 = vmul.f32 %v373, %v373
        %v406 = vmul.f32 %v374, %v374
        %v407 = vmul.f32 %v375, %v375
        %v408 = vmul.f32 %v376, %v376
        %v409 = vmul.f32 %v377, %v377
        %v410 = vmul.f32 %v378, %v378
        %v411 = vmul.f32 %v379, %v379
        %v412 = vmul.f32 %v380, %v380
        %v413 = vmul.f32 %v381, %v381
        %v414 = vmul.f32 %v382, %v382
        %v415 = vmul.f32 %v383, %v383
        %v416 = vmul.f32 %v384, %v384
        %v417 = vmul.f32 %v385, %v385
        %v418 = vmul.f32 %v386, %v386
        %v419 = vmul.f32 %v387, %v387
        %v420 = vmul.f32 %v388, %v388
        %v421 = vmul.f32 %v389, %v389
        %v422 = vmul.f32 %v390, %v390
        %v423 = vmul.f32 %v391, %v391
        %v424 = vmul.f32 %v392, %v392
        %v425 = vmul.f32 %v393, %v393
        %v426 = vmul.f32 %v394, %v394
        %v427 = vmul.f32 %v395, %v395
        %v428 = vmul.f32 %v396, %v396
        %v429 = vmul.f32 %v397, %v397
        %v430 = vmul.f32 %v398, %v398
        %v431 = vsel %vm231, %v399, 0.0
        %432 = vadd.xlane.f32.xlu0 %v431
        %v433 = vpop.xlane.xlu0 %432
        %v434 = vsel %vm231, %v400, 0.0
        %435 = vadd.xlane.f32.xlu0 %v434
        %v436 = vpop.xlane.xlu0 %435
        %v437 = vsel %vm231, %v401, 0.0
        %438 = vadd.xlane.f32.xlu0 %v437
        %v439 = vpop.xlane.xlu0 %438
        %v440 = vsel %vm231, %v402, 0.0
        %441 = vadd.xlane.f32.xlu0 %v440
        %v442 = vpop.xlane.xlu0 %441
        %v443 = vsel %vm231, %v403, 0.0
        %444 = vadd.xlane.f32.xlu0 %v443
        %v445 = vpop.xlane.xlu0 %444
        %v446 = vsel %vm231, %v404, 0.0
        %447 = vadd.xlane.f32.xlu0 %v446
        %v448 = vpop.xlane.xlu0 %447
        %v449 = vsel %vm231, %v405, 0.0
        %450 = vadd.xlane.f32.xlu0 %v449
        %v451 = vpop.xlane.xlu0 %450
        %v452 = vsel %vm231, %v406, 0.0
        %453 = vadd.xlane.f32.xlu0 %v452
        %v454 = vpop.xlane.xlu0 %453
        %v455 = vsel %vm231, %v407, 0.0
        %456 = vadd.xlane.f32.xlu0 %v455
        %v457 = vpop.xlane.xlu0 %456
        %v458 = vsel %vm231, %v408, 0.0
        %459 = vadd.xlane.f32.xlu0 %v458
        %v460 = vpop.xlane.xlu0 %459
        %v461 = vsel %vm231, %v409, 0.0
        %462 = vadd.xlane.f32.xlu0 %v461
        %v463 = vpop.xlane.xlu0 %462
        %v464 = vsel %vm231, %v410, 0.0
        %465 = vadd.xlane.f32.xlu0 %v464
        %v466 = vpop.xlane.xlu0 %465
        %v467 = vsel %vm231, %v411, 0.0
        %468 = vadd.xlane.f32.xlu0 %v467
        %v469 = vpop.xlane.xlu0 %468
        %v470 = vsel %vm231, %v412, 0.0
        %471 = vadd.xlane.f32.xlu0 %v470
        %v472 = vpop.xlane.xlu0 %471
        %v473 = vsel %vm231, %v413, 0.0
        %474 = vadd.xlane.f32.xlu0 %v473
        %v475 = vpop.xlane.xlu0 %474
        %v476 = vsel %vm231, %v414, 0.0
        %477 = vadd.xlane.f32.xlu0 %v476
        %v478 = vpop.xlane.xlu0 %477
        %v479 = vsel %vm231, %v415, 0.0
        %480 = vadd.xlane.f32.xlu0 %v479
        %v481 = vpop.xlane.xlu0 %480
        %v482 = vsel %vm231, %v416, 0.0
        %483 = vadd.xlane.f32.xlu0 %v482
        %v484 = vpop.xlane.xlu0 %483
        %v485 = vsel %vm231, %v417, 0.0
        %486 = vadd.xlane.f32.xlu0 %v485
        %v487 = vpop.xlane.xlu0 %486
        %v488 = vsel %vm231, %v418, 0.0
        %489 = vadd.xlane.f32.xlu0 %v488
        %v490 = vpop.xlane.xlu0 %489
        %v491 = vsel %vm231, %v419, 0.0
        %492 = vadd.xlane.f32.xlu0 %v491
        %v493 = vpop.xlane.xlu0 %492
        %v494 = vsel %vm231, %v420, 0.0
        %495 = vadd.xlane.f32.xlu0 %v494
        %v496 = vpop.xlane.xlu0 %495
        %v497 = vsel %vm231, %v421, 0.0
        %498 = vadd.xlane.f32.xlu0 %v497
        %v499 = vpop.xlane.xlu0 %498
        %v500 = vsel %vm231, %v422, 0.0
        %501 = vadd.xlane.f32.xlu0 %v500
        %v502 = vpop.xlane.xlu0 %501
        %v503 = vsel %vm231, %v423, 0.0
        %504 = vadd.xlane.f32.xlu0 %v503
        %v505 = vpop.xlane.xlu0 %504
        %v506 = vsel %vm231, %v424, 0.0
        %507 = vadd.xlane.f32.xlu0 %v506
        %v508 = vpop.xlane.xlu0 %507
        %v509 = vsel %vm231, %v425, 0.0
        %510 = vadd.xlane.f32.xlu0 %v509
        %v511 = vpop.xlane.xlu0 %510
        %v512 = vsel %vm231, %v426, 0.0
        %513 = vadd.xlane.f32.xlu0 %v512
        %v514 = vpop.xlane.xlu0 %513
        %v515 = vsel %vm231, %v427, 0.0
        %516 = vadd.xlane.f32.xlu0 %v515
        %v517 = vpop.xlane.xlu0 %516
        %v518 = vsel %vm231, %v428, 0.0
        %519 = vadd.xlane.f32.xlu0 %v518
        %v520 = vpop.xlane.xlu0 %519
        %v521 = vsel %vm231, %v429, 0.0
        %522 = vadd.xlane.f32.xlu0 %v521
        %v523 = vpop.xlane.xlu0 %522
        %v524 = vsel %vm231, %v430, 0.0
        %525 = vadd.xlane.f32.xlu0 %v524
        %v526 = vpop.xlane.xlu0 %525
        %v527 = vmul.f32 %v433, %v334
        %v528 = vmul.f32 %v436, %v334
        %v529 = vmul.f32 %v439, %v334
        %v530 = vmul.f32 %v442, %v334
        %v531 = vmul.f32 %v445, %v334
        %v532 = vmul.f32 %v448, %v334
        %v533 = vmul.f32 %v451, %v334
        %v534 = vmul.f32 %v454, %v334
        %v535 = vmul.f32 %v457, %v334
        %v536 = vmul.f32 %v460, %v334
        %v537 = vmul.f32 %v463, %v334
        %v538 = vmul.f32 %v466, %v334
        %v539 = vmul.f32 %v469, %v334
        %v540 = vmul.f32 %v472, %v334
        %v541 = vmul.f32 %v475, %v334
        %v542 = vmul.f32 %v478, %v334
        %v543 = vmul.f32 %v481, %v334
        %v544 = vmul.f32 %v484, %v334
        %v545 = vmul.f32 %v487, %v334
        %v546 = vmul.f32 %v490, %v334
        %v547 = vmul.f32 %v493, %v334
        %v548 = vmul.f32 %v496, %v334
        %v549 = vmul.f32 %v499, %v334
        %v550 = vmul.f32 %v502, %v334
        %v551 = vmul.f32 %v505, %v334
        %v552 = vmul.f32 %v508, %v334
        %v553 = vmul.f32 %v511, %v334
        %v554 = vmul.f32 %v514, %v334
        %v555 = vmul.f32 %v517, %v334
        %v556 = vmul.f32 %v520, %v334
        %v557 = vmul.f32 %v523, %v334
        %v558 = vmul.f32 %v526, %v334
        %v559 = vadd.f32 %v527, 1e-05
        %v560 = vadd.f32 %v528, 1e-05
        %v561 = vadd.f32 %v529, 1e-05
        %v562 = vadd.f32 %v530, 1e-05
        %v563 = vadd.f32 %v531, 1e-05
        %v564 = vadd.f32 %v532, 1e-05
        %v565 = vadd.f32 %v533, 1e-05
        %v566 = vadd.f32 %v534, 1e-05
        %v567 = vadd.f32 %v535, 1e-05
        %v568 = vadd.f32 %v536, 1e-05
        %v569 = vadd.f32 %v537, 1e-05
        %v570 = vadd.f32 %v538, 1e-05
        %v571 = vadd.f32 %v539, 1e-05
        %v572 = vadd.f32 %v540, 1e-05
        %v573 = vadd.f32 %v541, 1e-05
        %v574 = vadd.f32 %v542, 1e-05
        %v575 = vadd.f32 %v543, 1e-05
        %v576 = vadd.f32 %v544, 1e-05
        %v577 = vadd.f32 %v545, 1e-05
        %v578 = vadd.f32 %v546, 1e-05
        %v579 = vadd.f32 %v547, 1e-05
        %v580 = vadd.f32 %v548, 1e-05
        %v581 = vadd.f32 %v549, 1e-05
        %v582 = vadd.f32 %v550, 1e-05
        %v583 = vadd.f32 %v551, 1e-05
        %v584 = vadd.f32 %v552, 1e-05
        %v585 = vadd.f32 %v553, 1e-05
        %v586 = vadd.f32 %v554, 1e-05
        %v587 = vadd.f32 %v555, 1e-05
        %v588 = vadd.f32 %v556, 1e-05
        %v589 = vadd.f32 %v557, 1e-05
        %v590 = vadd.f32 %v558, 1e-05
        %v591 = vrsqrt.pop %v559
        %v592 = vmul.f32 %v591, %v559
        %v593 = vmul.f32 %v592, %v591
        %v594 = vmul.f32 0.5, %v593
        %v595 = vsub.f32 1.5, %v594
        %v596 = vmul.f32 %v591, %v595
        %vm597 = vweird.f32 %v559
        %vm598 = vweird.f32 %v591
        %vm599 = vmor %vm597, %vm598
        %v600 = vsel %vm599, %v591, %v596
        %v601 = vrsqrt.pop %v560
        %v602 = vmul.f32 %v601, %v560
        %v603 = vmul.f32 %v602, %v601
        %v604 = vmul.f32 0.5, %v603
        %v605 = vsub.f32 1.5, %v604
        %v606 = vmul.f32 %v601, %v605
        %vm607 = vweird.f32 %v560
        %vm608 = vweird.f32 %v601
        %vm609 = vmor %vm607, %vm608
        %v610 = vsel %vm609, %v601, %v606
        %v611 = vrsqrt.pop %v561
        %v612 = vmul.f32 %v611, %v561
        %v613 = vmul.f32 %v612, %v611
        %v614 = vmul.f32 0.5, %v613
        %v615 = vsub.f32 1.5, %v614
        %v616 = vmul.f32 %v611, %v615
        %vm617 = vweird.f32 %v561
        %vm618 = vweird.f32 %v611
        %vm619 = vmor %vm617, %vm618
        %v620 = vsel %vm619, %v611, %v616
        %v621 = vrsqrt.pop %v562
        %v622 = vmul.f32 %v621, %v562
        %v623 = vmul.f32 %v622, %v621
        %v624 = vmul.f32 0.5, %v623
        %v625 = vsub.f32 1.5, %v624
        %v626 = vmul.f32 %v621, %v625
        %vm627 = vweird.f32 %v562
        %vm628 = vweird.f32 %v621
        %vm629 = vmor %vm627, %vm628
        %v630 = vsel %vm629, %v621, %v626
        %v631 = vrsqrt.pop %v563
        %v632 = vmul.f32 %v631, %v563
        %v633 = vmul.f32 %v632, %v631
        %v634 = vmul.f32 0.5, %v633
        %v635 = vsub.f32 1.5, %v634
        %v636 = vmul.f32 %v631, %v635
        %vm637 = vweird.f32 %v563
        %vm638 = vweird.f32 %v631
        %vm639 = vmor %vm637, %vm638
        %v640 = vsel %vm639, %v631, %v636
        %v641 = vrsqrt.pop %v564
        %v642 = vmul.f32 %v641, %v564
        %v643 = vmul.f32 %v642, %v641
        %v644 = vmul.f32 0.5, %v643
        %v645 = vsub.f32 1.5, %v644
        %v646 = vmul.f32 %v641, %v645
        %vm647 = vweird.f32 %v564
        %vm648 = vweird.f32 %v641
        %vm649 = vmor %vm647, %vm648
        %v650 = vsel %vm649, %v641, %v646
        %v651 = vrsqrt.pop %v565
        %v652 = vmul.f32 %v651, %v565
        %v653 = vmul.f32 %v652, %v651
        %v654 = vmul.f32 0.5, %v653
        %v655 = vsub.f32 1.5, %v654
        %v656 = vmul.f32 %v651, %v655
        %vm657 = vweird.f32 %v565
        %vm658 = vweird.f32 %v651
        %vm659 = vmor %vm657, %vm658
        %v660 = vsel %vm659, %v651, %v656
        %v661 = vrsqrt.pop %v566
        %v662 = vmul.f32 %v661, %v566
        %v663 = vmul.f32 %v662, %v661
        %v664 = vmul.f32 0.5, %v663
        %v665 = vsub.f32 1.5, %v664
        %v666 = vmul.f32 %v661, %v665
        %vm667 = vweird.f32 %v566
        %vm668 = vweird.f32 %v661
        %vm669 = vmor %vm667, %vm668
        %v670 = vsel %vm669, %v661, %v666
        %v671 = vrsqrt.pop %v567
        %v672 = vmul.f32 %v671, %v567
        %v673 = vmul.f32 %v672, %v671
        %v674 = vmul.f32 0.5, %v673
        %v675 = vsub.f32 1.5, %v674
        %v676 = vmul.f32 %v671, %v675
        %vm677 = vweird.f32 %v567
        %vm678 = vweird.f32 %v671
        %vm679 = vmor %vm677, %vm678
        %v680 = vsel %vm679, %v671, %v676
        %v681 = vrsqrt.pop %v568
        %v682 = vmul.f32 %v681, %v568
        %v683 = vmul.f32 %v682, %v681
        %v684 = vmul.f32 0.5, %v683
        %v685 = vsub.f32 1.5, %v684
        %v686 = vmul.f32 %v681, %v685
        %vm687 = vweird.f32 %v568
        %vm688 = vweird.f32 %v681
        %vm689 = vmor %vm687, %vm688
        %v690 = vsel %vm689, %v681, %v686
        %v691 = vrsqrt.pop %v569
        %v692 = vmul.f32 %v691, %v569
        %v693 = vmul.f32 %v692, %v691
        %v694 = vmul.f32 0.5, %v693
        %v695 = vsub.f32 1.5, %v694
        %v696 = vmul.f32 %v691, %v695
        %vm697 = vweird.f32 %v569
        %vm698 = vweird.f32 %v691
        %vm699 = vmor %vm697, %vm698
        %v700 = vsel %vm699, %v691, %v696
        %v701 = vrsqrt.pop %v570
        %v702 = vmul.f32 %v701, %v570
        %v703 = vmul.f32 %v702, %v701
        %v704 = vmul.f32 0.5, %v703
        %v705 = vsub.f32 1.5, %v704
        %v706 = vmul.f32 %v701, %v705
        %vm707 = vweird.f32 %v570
        %vm708 = vweird.f32 %v701
        %vm709 = vmor %vm707, %vm708
        %v710 = vsel %vm709, %v701, %v706
        %v711 = vrsqrt.pop %v571
        %v712 = vmul.f32 %v711, %v571
        %v713 = vmul.f32 %v712, %v711
        %v714 = vmul.f32 0.5, %v713
        %v715 = vsub.f32 1.5, %v714
        %v716 = vmul.f32 %v711, %v715
        %vm717 = vweird.f32 %v571
        %vm718 = vweird.f32 %v711
        %vm719 = vmor %vm717, %vm718
        %v720 = vsel %vm719, %v711, %v716
        %v721 = vrsqrt.pop %v572
        %v722 = vmul.f32 %v721, %v572
        %v723 = vmul.f32 %v722, %v721
        %v724 = vmul.f32 0.5, %v723
        %v725 = vsub.f32 1.5, %v724
        %v726 = vmul.f32 %v721, %v725
        %vm727 = vweird.f32 %v572
        %vm728 = vweird.f32 %v721
        %vm729 = vmor %vm727, %vm728
        %v730 = vsel %vm729, %v721, %v726
        %v731 = vrsqrt.pop %v573
        %v732 = vmul.f32 %v731, %v573
        %v733 = vmul.f32 %v732, %v731
        %v734 = vmul.f32 0.5, %v733
        %v735 = vsub.f32 1.5, %v734
        %v736 = vmul.f32 %v731, %v735
        %vm737 = vweird.f32 %v573
        %vm738 = vweird.f32 %v731
        %vm739 = vmor %vm737, %vm738
        %v740 = vsel %vm739, %v731, %v736
        %v741 = vrsqrt.pop %v574
        %v742 = vmul.f32 %v741, %v574
        %v743 = vmul.f32 %v742, %v741
        %v744 = vmul.f32 0.5, %v743
        %v745 = vsub.f32 1.5, %v744
        %v746 = vmul.f32 %v741, %v745
        %vm747 = vweird.f32 %v574
        %vm748 = vweird.f32 %v741
        %vm749 = vmor %vm747, %vm748
        %v750 = vsel %vm749, %v741, %v746
        %v751 = vrsqrt.pop %v575
        %v752 = vmul.f32 %v751, %v575
        %v753 = vmul.f32 %v752, %v751
        %v754 = vmul.f32 0.5, %v753
        %v755 = vsub.f32 1.5, %v754
        %v756 = vmul.f32 %v751, %v755
        %vm757 = vweird.f32 %v575
        %vm758 = vweird.f32 %v751
        %vm759 = vmor %vm757, %vm758
        %v760 = vsel %vm759, %v751, %v756
        %v761 = vrsqrt.pop %v576
        %v762 = vmul.f32 %v761, %v576
        %v763 = vmul.f32 %v762, %v761
        %v764 = vmul.f32 0.5, %v763
        %v765 = vsub.f32 1.5, %v764
        %v766 = vmul.f32 %v761, %v765
        %vm767 = vweird.f32 %v576
        %vm768 = vweird.f32 %v761
        %vm769 = vmor %vm767, %vm768
        %v770 = vsel %vm769, %v761, %v766
        %v771 = vrsqrt.pop %v577
        %v772 = vmul.f32 %v771, %v577
        %v773 = vmul.f32 %v772, %v771
        %v774 = vmul.f32 0.5, %v773
        %v775 = vsub.f32 1.5, %v774
        %v776 = vmul.f32 %v771, %v775
        %vm777 = vweird.f32 %v577
        %vm778 = vweird.f32 %v771
        %vm779 = vmor %vm777, %vm778
        %v780 = vsel %vm779, %v771, %v776
        %v781 = vrsqrt.pop %v578
        %v782 = vmul.f32 %v781, %v578
        %v783 = vmul.f32 %v782, %v781
        %v784 = vmul.f32 0.5, %v783
        %v785 = vsub.f32 1.5, %v784
        %v786 = vmul.f32 %v781, %v785
        %vm787 = vweird.f32 %v578
        %vm788 = vweird.f32 %v781
        %vm789 = vmor %vm787, %vm788
        %v790 = vsel %vm789, %v781, %v786
        %v791 = vrsqrt.pop %v579
        %v792 = vmul.f32 %v791, %v579
        %v793 = vmul.f32 %v792, %v791
        %v794 = vmul.f32 0.5, %v793
        %v795 = vsub.f32 1.5, %v794
        %v796 = vmul.f32 %v791, %v795
        %vm797 = vweird.f32 %v579
        %vm798 = vweird.f32 %v791
        %vm799 = vmor %vm797, %vm798
        %v800 = vsel %vm799, %v791, %v796
        %v801 = vrsqrt.pop %v580
        %v802 = vmul.f32 %v801, %v580
        %v803 = vmul.f32 %v802, %v801
        %v804 = vmul.f32 0.5, %v803
        %v805 = vsub.f32 1.5, %v804
        %v806 = vmul.f32 %v801, %v805
        %vm807 = vweird.f32 %v580
        %vm808 = vweird.f32 %v801
        %vm809 = vmor %vm807, %vm808
        %v810 = vsel %vm809, %v801, %v806
        %v811 = vrsqrt.pop %v581
        %v812 = vmul.f32 %v811, %v581
        %v813 = vmul.f32 %v812, %v811
        %v814 = vmul.f32 0.5, %v813
        %v815 = vsub.f32 1.5, %v814
        %v816 = vmul.f32 %v811, %v815
        %vm817 = vweird.f32 %v581
        %vm818 = vweird.f32 %v811
        %vm819 = vmor %vm817, %vm818
        %v820 = vsel %vm819, %v811, %v816
        %v821 = vrsqrt.pop %v582
        %v822 = vmul.f32 %v821, %v582
        %v823 = vmul.f32 %v822, %v821
        %v824 = vmul.f32 0.5, %v823
        %v825 = vsub.f32 1.5, %v824
        %v826 = vmul.f32 %v821, %v825
        %vm827 = vweird.f32 %v582
        %vm828 = vweird.f32 %v821
        %vm829 = vmor %vm827, %vm828
        %v830 = vsel %vm829, %v821, %v826
        %v831 = vrsqrt.pop %v583
        %v832 = vmul.f32 %v831, %v583
        %v833 = vmul.f32 %v832, %v831
        %v834 = vmul.f32 0.5, %v833
        %v835 = vsub.f32 1.5, %v834
        %v836 = vmul.f32 %v831, %v835
        %vm837 = vweird.f32 %v583
        %vm838 = vweird.f32 %v831
        %vm839 = vmor %vm837, %vm838
        %v840 = vsel %vm839, %v831, %v836
        %v841 = vrsqrt.pop %v584
        %v842 = vmul.f32 %v841, %v584
        %v843 = vmul.f32 %v842, %v841
        %v844 = vmul.f32 0.5, %v843
        %v845 = vsub.f32 1.5, %v844
        %v846 = vmul.f32 %v841, %v845
        %vm847 = vweird.f32 %v584
        %vm848 = vweird.f32 %v841
        %vm849 = vmor %vm847, %vm848
        %v850 = vsel %vm849, %v841, %v846
        %v851 = vrsqrt.pop %v585
        %v852 = vmul.f32 %v851, %v585
        %v853 = vmul.f32 %v852, %v851
        %v854 = vmul.f32 0.5, %v853
        %v855 = vsub.f32 1.5, %v854
        %v856 = vmul.f32 %v851, %v855
        %vm857 = vweird.f32 %v585
        %vm858 = vweird.f32 %v851
        %vm859 = vmor %vm857, %vm858
        %v860 = vsel %vm859, %v851, %v856
        %v861 = vrsqrt.pop %v586
        %v862 = vmul.f32 %v861, %v586
        %v863 = vmul.f32 %v862, %v861
        %v864 = vmul.f32 0.5, %v863
        %v865 = vsub.f32 1.5, %v864
        %v866 = vmul.f32 %v861, %v865
        %vm867 = vweird.f32 %v586
        %vm868 = vweird.f32 %v861
        %vm869 = vmor %vm867, %vm868
        %v870 = vsel %vm869, %v861, %v866
        %v871 = vrsqrt.pop %v587
        %v872 = vmul.f32 %v871, %v587
        %v873 = vmul.f32 %v872, %v871
        %v874 = vmul.f32 0.5, %v873
        %v875 = vsub.f32 1.5, %v874
        %v876 = vmul.f32 %v871, %v875
        %vm877 = vweird.f32 %v587
        %vm878 = vweird.f32 %v871
        %vm879 = vmor %vm877, %vm878
        %v880 = vsel %vm879, %v871, %v876
        %v881 = vrsqrt.pop %v588
        %v882 = vmul.f32 %v881, %v588
        %v883 = vmul.f32 %v882, %v881
        %v884 = vmul.f32 0.5, %v883
        %v885 = vsub.f32 1.5, %v884
        %v886 = vmul.f32 %v881, %v885
        %vm887 = vweird.f32 %v588
        %vm888 = vweird.f32 %v881
        %vm889 = vmor %vm887, %vm888
        %v890 = vsel %vm889, %v881, %v886
        %v891 = vrsqrt.pop %v589
        %v892 = vmul.f32 %v891, %v589
        %v893 = vmul.f32 %v892, %v891
        %v894 = vmul.f32 0.5, %v893
        %v895 = vsub.f32 1.5, %v894
        %v896 = vmul.f32 %v891, %v895
        %vm897 = vweird.f32 %v589
        %vm898 = vweird.f32 %v891
        %vm899 = vmor %vm897, %vm898
        %v900 = vsel %vm899, %v891, %v896
        %v901 = vrsqrt.pop %v590
        %v902 = vmul.f32 %v901, %v590
        %v903 = vmul.f32 %v902, %v901
        %v904 = vmul.f32 0.5, %v903
        %v905 = vsub.f32 1.5, %v904
        %v906 = vmul.f32 %v901, %v905
        %vm907 = vweird.f32 %v590
        %vm908 = vweird.f32 %v901
        %vm909 = vmor %vm907, %vm908
        %v910 = vsel %vm909, %v901, %v906
        %v911 = vmul.f32 %v367, %v600
        %v912 = vmul.f32 %v368, %v610
        %v913 = vmul.f32 %v369, %v620
        %v914 = vmul.f32 %v370, %v630
        %v915 = vmul.f32 %v371, %v640
        %v916 = vmul.f32 %v372, %v650
        %v917 = vmul.f32 %v373, %v660
        %v918 = vmul.f32 %v374, %v670
        %v919 = vmul.f32 %v375, %v680
        %v920 = vmul.f32 %v376, %v690
        %v921 = vmul.f32 %v377, %v700
        %v922 = vmul.f32 %v378, %v710
        %v923 = vmul.f32 %v379, %v720
        %v924 = vmul.f32 %v380, %v730
        %v925 = vmul.f32 %v381, %v740
        %v926 = vmul.f32 %v382, %v750
        %v927 = vmul.f32 %v383, %v760
        %v928 = vmul.f32 %v384, %v770
        %v929 = vmul.f32 %v385, %v780
        %v930 = vmul.f32 %v386, %v790
        %v931 = vmul.f32 %v387, %v800
        %v932 = vmul.f32 %v388, %v810
        %v933 = vmul.f32 %v389, %v820
        %v934 = vmul.f32 %v390, %v830
        %v935 = vmul.f32 %v391, %v840
        %v936 = vmul.f32 %v392, %v850
        %v937 = vmul.f32 %v393, %v860
        %v938 = vmul.f32 %v394, %v870
        %v939 = vmul.f32 %v395, %v880
        %v940 = vmul.f32 %v396, %v890
        %v941 = vmul.f32 %v397, %v900
        %v942 = vmul.f32 %v398, %v910
        %v943 = vpack.c.bf16 %v912, %v911
        %v944 = vpack.c.bf16 %v914, %v913
        %v945 = vpack.c.bf16 %v916, %v915
        %v946 = vpack.c.bf16 %v918, %v917
        %v947 = vpack.c.bf16 %v920, %v919
        %v948 = vpack.c.bf16 %v922, %v921
        %v949 = vpack.c.bf16 %v924, %v923
        %v950 = vpack.c.bf16 %v926, %v925
        %v951 = vpack.c.bf16 %v928, %v927
        %v952 = vpack.c.bf16 %v930, %v929
        %v953 = vpack.c.bf16 %v932, %v931
        %v954 = vpack.c.bf16 %v934, %v933
        %v955 = vpack.c.bf16 %v936, %v935
        %v956 = vpack.c.bf16 %v938, %v937
        %v957 = vpack.c.bf16 %v940, %v939
        %v958 = vpack.c.bf16 %v942, %v941
        %v959 = vld [vmem:[%s1] sm:$0xf]
        %v960 = vld [vmem:[%s1 + $0x4] sm:$0xf]
        %v961 = vld [vmem:[%s2] sm:$0x1]
        %v963 = vperm.slane %v961, 0
        %v967 = vunpack.c.l.b16 %v959
        %v968 = vunpack.c.l.b16 %v960
        %v969 = vpack.c.b16 %v968, %v967
        %v972 = vsel %vm231, %v943, 0
        %v975 = vsel %vm231, %v944, 0
        %v978 = vsel %vm231, %v945, 0
        %v981 = vsel %vm231, %v946, 0
        %v984 = vsel %vm231, %v947, 0
        %v987 = vsel %vm231, %v948, 0
        %v990 = vsel %vm231, %v949, 0
        %v993 = vsel %vm231, %v950, 0
        %v996 = vsel %vm231, %v951, 0
        %v999 = vsel %vm231, %v952, 0
        %v1002 = vsel %vm231, %v953, 0
        %v1005 = vsel %vm231, %v954, 0
        %v1008 = vsel %vm231, %v955, 0
        %v1011 = vsel %vm231, %v956, 0
        %v1014 = vsel %vm231, %v957, 0
        %v1017 = vsel %vm231, %v958, 0
        %1019 = vmatpush.bf16.msra.mxu0 0
        %1020 = vmatpush.bf16.msra.mxu0 0
        %1021 = vmatpush.bf16.msra.mxu0 0
        %1022 = vmatpush.bf16.msra.mxu0 0
        %1023 = vmatpush.bf16.msra.mxu0 0
        %1024 = vmatpush.bf16.msra.mxu0 0
        %1025 = vmatpush.bf16.msra.mxu0 0
        %1026 = vmatpush.bf16.msra.mxu0 %v969
        %1027 = vmatmul.bf16.gmra.mxu0 %v972
        %v1028 = vpop.f32.mrf.mxu0
        %v1029 = vadd.f32 %v963, %v1028
        %v1030 = vpop.f32.mrf.mxu0
        %v1031 = vadd.f32 %v963, %v1030
        %1032 = vmatmul.bf16.gmra.mxu0 %v975
        %v1033 = vpop.f32.mrf.mxu0
        %v1034 = vadd.f32 %v963, %v1033
        %v1035 = vpop.f32.mrf.mxu0
        %v1036 = vadd.f32 %v963, %v1035
        %1037 = vmatmul.bf16.gmra.mxu0 %v978
        %v1038 = vpop.f32.mrf.mxu0
        %v1039 = vadd.f32 %v963, %v1038
        %v1040 = vpop.f32.mrf.mxu0
        %v1041 = vadd.f32 %v963, %v1040
        %1042 = vmatmul.bf16.gmra.mxu0 %v981
        %v1043 = vpop.f32.mrf.mxu0
        %v1044 = vadd.f32 %v963, %v1043
        %v1045 = vpop.f32.mrf.mxu0
        %v1046 = vadd.f32 %v963, %v1045
        %1047 = vmatmul.bf16.gmra.mxu0 %v984
        %v1048 = vpop.f32.mrf.mxu0
        %v1049 = vadd.f32 %v963, %v1048
        %v1050 = vpop.f32.mrf.mxu0
        %v1051 = vadd.f32 %v963, %v1050
        %1052 = vmatmul.bf16.gmra.mxu0 %v987
        %v1053 = vpop.f32.mrf.mxu0
        %v1054 = vadd.f32 %v963, %v1053
        %v1055 = vpop.f32.mrf.mxu0
        %v1056 = vadd.f32 %v963, %v1055
        %1057 = vmatmul.bf16.gmra.mxu0 %v990
        %v1058 = vpop.f32.mrf.mxu0
        %v1059 = vadd.f32 %v963, %v1058
        %v1060 = vpop.f32.mrf.mxu0
        %v1061 = vadd.f32 %v963, %v1060
        %1062 = vmatmul.bf16.gmra.mxu0 %v993
        %v1063 = vpop.f32.mrf.mxu0
        %v1064 = vadd.f32 %v963, %v1063
        %v1065 = vpop.f32.mrf.mxu0
        %v1066 = vadd.f32 %v963, %v1065
        %1067 = vmatmul.bf16.gmra.mxu0 %v996
        %v1068 = vpop.f32.mrf.mxu0
        %v1069 = vadd.f32 %v963, %v1068
        %v1070 = vpop.f32.mrf.mxu0
        %v1071 = vadd.f32 %v963, %v1070
        %1072 = vmatmul.bf16.gmra.mxu0 %v999
        %v1073 = vpop.f32.mrf.mxu0
        %v1074 = vadd.f32 %v963, %v1073
        %v1075 = vpop.f32.mrf.mxu0
        %v1076 = vadd.f32 %v963, %v1075
        %1077 = vmatmul.bf16.gmra.mxu0 %v1002
        %v1078 = vpop.f32.mrf.mxu0
        %v1079 = vadd.f32 %v963, %v1078
        %v1080 = vpop.f32.mrf.mxu0
        %v1081 = vadd.f32 %v963, %v1080
        %1082 = vmatmul.bf16.gmra.mxu0 %v1005
        %v1083 = vpop.f32.mrf.mxu0
        %v1084 = vadd.f32 %v963, %v1083
        %v1085 = vpop.f32.mrf.mxu0
        %v1086 = vadd.f32 %v963, %v1085
        %1087 = vmatmul.bf16.gmra.mxu0 %v1008
        %v1088 = vpop.f32.mrf.mxu0
        %v1089 = vadd.f32 %v963, %v1088
        %v1090 = vpop.f32.mrf.mxu0
        %v1091 = vadd.f32 %v963, %v1090
        %1092 = vmatmul.bf16.gmra.mxu0 %v1011
        %v1093 = vpop.f32.mrf.mxu0
        %v1094 = vadd.f32 %v963, %v1093
        %v1095 = vpop.f32.mrf.mxu0
        %v1096 = vadd.f32 %v963, %v1095
        %1097 = vmatmul.bf16.gmra.mxu0 %v1014
        %v1098 = vpop.f32.mrf.mxu0
        %v1099 = vadd.f32 %v963, %v1098
        %v1100 = vpop.f32.mrf.mxu0
        %v1101 = vadd.f32 %v963, %v1100
        %1102 = vmatmul.bf16.gmra.mxu0 %v1017
        %v1103 = vpop.f32.mrf.mxu0
        %v1104 = vadd.f32 %v963, %v1103
        %v1105 = vpop.f32.mrf.mxu0
        %v1106 = vadd.f32 %v963, %v1105
        %1107 = vdwg.mxu0
        %1108 = vst.msk [vmem:[%s196] sm:$0xff] %vm231, %v1029
        %1109 = vst.msk [vmem:[%s196 + $0x10] sm:$0xff] %vm231, %v1031
        %1110 = vst.msk [vmem:[%s196 + $0x20] sm:$0xff] %vm231, %v1034
        %1111 = vst.msk [vmem:[%s196 + $0x30] sm:$0xff] %vm231, %v1036
        %1112 = vst.msk [vmem:[%s196 + $0x40] sm:$0xff] %vm231, %v1039
        %1113 = vst.msk [vmem:[%s196 + $0x50] sm:$0xff] %vm231, %v1041
        %1114 = vst.msk [vmem:[%s196 + $0x60] sm:$0xff] %vm231, %v1044
        %1115 = vst.msk [vmem:[%s196 + $0x70] sm:$0xff] %vm231, %v1046
        %1116 = vst.msk [vmem:[%s196 + $0x100] sm:$0xff] %vm231, %v1049
        %1117 = vst.msk [vmem:[%s196 + $0x110] sm:$0xff] %vm231, %v1051
        %1118 = vst.msk [vmem:[%s196 + $0x120] sm:$0xff] %vm231, %v1054
        %1119 = vst.msk [vmem:[%s196 + $0x130] sm:$0xff] %vm231, %v1056
        %1120 = vst.msk [vmem:[%s196 + $0x140] sm:$0xff] %vm231, %v1059
        %1121 = vst.msk [vmem:[%s196 + $0x150] sm:$0xff] %vm231, %v1061
        %1122 = vst.msk [vmem:[%s196 + $0x160] sm:$0xff] %vm231, %v1064
        %1123 = vst.msk [vmem:[%s196 + $0x170] sm:$0xff] %vm231, %v1066
        %1124 = vst.msk [vmem:[%s196 + $0x200] sm:$0xff] %vm231, %v1069
        %1125 = vst.msk [vmem:[%s196 + $0x210] sm:$0xff] %vm231, %v1071
        %1126 = vst.msk [vmem:[%s196 + $0x220] sm:$0xff] %vm231, %v1074
        %1127 = vst.msk [vmem:[%s196 + $0x230] sm:$0xff] %vm231, %v1076
        %1128 = vst.msk [vmem:[%s196 + $0x240] sm:$0xff] %vm231, %v1079
        %1129 = vst.msk [vmem:[%s196 + $0x250] sm:$0xff] %vm231, %v1081
        %1130 = vst.msk [vmem:[%s196 + $0x260] sm:$0xff] %vm231, %v1084
        %1131 = vst.msk [vmem:[%s196 + $0x270] sm:$0xff] %vm231, %v1086
        %1132 = vst.msk [vmem:[%s196 + $0x300] sm:$0xff] %vm231, %v1089
        %1133 = vst.msk [vmem:[%s196 + $0x310] sm:$0xff] %vm231, %v1091
        %1134 = vst.msk [vmem:[%s196 + $0x320] sm:$0xff] %vm231, %v1094
        %1135 = vst.msk [vmem:[%s196 + $0x330] sm:$0xff] %vm231, %v1096
        %1136 = vst.msk [vmem:[%s196 + $0x340] sm:$0xff] %vm231, %v1099
        %1137 = vst.msk [vmem:[%s196 + $0x350] sm:$0xff] %vm231, %v1101
        %1138 = vst.msk [vmem:[%s196 + $0x360] sm:$0xff] %vm231, %v1104
        %1139 = vst.msk [vmem:[%s196 + $0x370] sm:$0xff] %vm231, %v1106
        %s1140 = scalar_lea.vmem %s1, 8
        %v1141 = vld [vmem:[%s1140] sm:$0xf]
        %v1142 = vld [vmem:[%s1140 + $0x4] sm:$0xf]
        %s1143 = scalar_lea.vmem %s2, 1
        %v1144 = vld [vmem:[%s1143] sm:$0x1]
        %v1146 = vperm.slane %v1144, 0
        %v1150 = vunpack.c.l.b16 %v1141
        %v1151 = vunpack.c.l.b16 %v1142
        %v1152 = vpack.c.b16 %v1151, %v1150
        %1154 = vmatpush.bf16.msra.mxu0 0
        %1155 = vmatpush.bf16.msra.mxu0 0
        %1156 = vmatpush.bf16.msra.mxu0 0
        %1157 = vmatpush.bf16.msra.mxu0 0
        %1158 = vmatpush.bf16.msra.mxu0 0
        %1159 = vmatpush.bf16.msra.mxu0 0
        %1160 = vmatpush.bf16.msra.mxu0 0
        %1161 = vmatpush.bf16.msra.mxu0 %v1152
        %1162 = vmatmul.bf16.gmra.mxu0 %v972
        %v1163 = vpop.f32.mrf.mxu0
        %v1164 = vadd.f32 %v1146, %v1163
        %v1165 = vpop.f32.mrf.mxu0
        %v1166 = vadd.f32 %v1146, %v1165
        %1167 = vmatmul.bf16.gmra.mxu0 %v975
        %v1168 = vpop.f32.mrf.mxu0
        %v1169 = vadd.f32 %v1146, %v1168
        %v1170 = vpop.f32.mrf.mxu0
        %v1171 = vadd.f32 %v1146, %v1170
        %1172 = vmatmul.bf16.gmra.mxu0 %v978
        %v1173 = vpop.f32.mrf.mxu0
        %v1174 = vadd.f32 %v1146, %v1173
        %v1175 = vpop.f32.mrf.mxu0
        %v1176 = vadd.f32 %v1146, %v1175
        %1177 = vmatmul.bf16.gmra.mxu0 %v981
        %v1178 = vpop.f32.mrf.mxu0
        %v1179 = vadd.f32 %v1146, %v1178
        %v1180 = vpop.f32.mrf.mxu0
        %v1181 = vadd.f32 %v1146, %v1180
        %1182 = vmatmul.bf16.gmra.mxu0 %v984
        %v1183 = vpop.f32.mrf.mxu0
        %v1184 = vadd.f32 %v1146, %v1183
        %v1185 = vpop.f32.mrf.mxu0
        %v1186 = vadd.f32 %v1146, %v1185
        %1187 = vmatmul.bf16.gmra.mxu0 %v987
        %v1188 = vpop.f32.mrf.mxu0
        %v1189 = vadd.f32 %v1146, %v1188
        %v1190 = vpop.f32.mrf.mxu0
        %v1191 = vadd.f32 %v1146, %v1190
        %1192 = vmatmul.bf16.gmra.mxu0 %v990
        %v1193 = vpop.f32.mrf.mxu0
        %v1194 = vadd.f32 %v1146, %v1193
        %v1195 = vpop.f32.mrf.mxu0
        %v1196 = vadd.f32 %v1146, %v1195
        %1197 = vmatmul.bf16.gmra.mxu0 %v993
        %v1198 = vpop.f32.mrf.mxu0
        %v1199 = vadd.f32 %v1146, %v1198
        %v1200 = vpop.f32.mrf.mxu0
        %v1201 = vadd.f32 %v1146, %v1200
        %1202 = vmatmul.bf16.gmra.mxu0 %v996
        %v1203 = vpop.f32.mrf.mxu0
        %v1204 = vadd.f32 %v1146, %v1203
        %v1205 = vpop.f32.mrf.mxu0
        %v1206 = vadd.f32 %v1146, %v1205
        %1207 = vmatmul.bf16.gmra.mxu0 %v999
        %v1208 = vpop.f32.mrf.mxu0
        %v1209 = vadd.f32 %v1146, %v1208
        %v1210 = vpop.f32.mrf.mxu0
        %v1211 = vadd.f32 %v1146, %v1210
        %1212 = vmatmul.bf16.gmra.mxu0 %v1002
        %v1213 = vpop.f32.mrf.mxu0
        %v1214 = vadd.f32 %v1146, %v1213
        %v1215 = vpop.f32.mrf.mxu0
        %v1216 = vadd.f32 %v1146, %v1215
        %1217 = vmatmul.bf16.gmra.mxu0 %v1005
        %v1218 = vpop.f32.mrf.mxu0
        %v1219 = vadd.f32 %v1146, %v1218
        %v1220 = vpop.f32.mrf.mxu0
        %v1221 = vadd.f32 %v1146, %v1220
        %1222 = vmatmul.bf16.gmra.mxu0 %v1008
        %v1223 = vpop.f32.mrf.mxu0
        %v1224 = vadd.f32 %v1146, %v1223
        %v1225 = vpop.f32.mrf.mxu0
        %v1226 = vadd.f32 %v1146, %v1225
        %1227 = vmatmul.bf16.gmra.mxu0 %v1011
        %v1228 = vpop.f32.mrf.mxu0
        %v1229 = vadd.f32 %v1146, %v1228
        %v1230 = vpop.f32.mrf.mxu0
        %v1231 = vadd.f32 %v1146, %v1230
        %1232 = vmatmul.bf16.gmra.mxu0 %v1014
        %v1233 = vpop.f32.mrf.mxu0
        %v1234 = vadd.f32 %v1146, %v1233
        %v1235 = vpop.f32.mrf.mxu0
        %v1236 = vadd.f32 %v1146, %v1235
        %1237 = vmatmul.bf16.gmra.mxu0 %v1017
        %v1238 = vpop.f32.mrf.mxu0
        %v1239 = vadd.f32 %v1146, %v1238
        %v1240 = vpop.f32.mrf.mxu0
        %v1241 = vadd.f32 %v1146, %v1240
        %1242 = vdwg.mxu0
        %s1243 = scalar_lea.vmem %s196, 8
        %1244 = vst.msk [vmem:[%s1243] sm:$0xff] %vm231, %v1164
        %1245 = vst.msk [vmem:[%s1243 + $0x10] sm:$0xff] %vm231, %v1166
        %1246 = vst.msk [vmem:[%s1243 + $0x20] sm:$0xff] %vm231, %v1169
        %1247 = vst.msk [vmem:[%s1243 + $0x30] sm:$0xff] %vm231, %v1171
        %1248 = vst.msk [vmem:[%s1243 + $0x40] sm:$0xff] %vm231, %v1174
        %1249 = vst.msk [vmem:[%s1243 + $0x50] sm:$0xff] %vm231, %v1176
        %1250 = vst.msk [vmem:[%s1243 + $0x60] sm:$0xff] %vm231, %v1179
        %1251 = vst.msk [vmem:[%s1243 + $0x70] sm:$0xff] %vm231, %v1181
        %1252 = vst.msk [vmem:[%s1243 + $0x100] sm:$0xff] %vm231, %v1184
        %1253 = vst.msk [vmem:[%s1243 + $0x110] sm:$0xff] %vm231, %v1186
        %1254 = vst.msk [vmem:[%s1243 + $0x120] sm:$0xff] %vm231, %v1189
        %1255 = vst.msk [vmem:[%s1243 + $0x130] sm:$0xff] %vm231, %v1191
        %1256 = vst.msk [vmem:[%s1243 + $0x140] sm:$0xff] %vm231, %v1194
        %1257 = vst.msk [vmem:[%s1243 + $0x150] sm:$0xff] %vm231, %v1196
        %1258 = vst.msk [vmem:[%s1243 + $0x160] sm:$0xff] %vm231, %v1199
        %1259 = vst.msk [vmem:[%s1243 + $0x170] sm:$0xff] %vm231, %v1201
        %1260 = vst.msk [vmem:[%s1243 + $0x200] sm:$0xff] %vm231, %v1204
        %1261 = vst.msk [vmem:[%s1243 + $0x210] sm:$0xff] %vm231, %v1206
        %1262 = vst.msk [vmem:[%s1243 + $0x220] sm:$0xff] %vm231, %v1209
        %1263 = vst.msk [vmem:[%s1243 + $0x230] sm:$0xff] %vm231, %v1211
        %1264 = vst.msk [vmem:[%s1243 + $0x240] sm:$0xff] %vm231, %v1214
        %1265 = vst.msk [vmem:[%s1243 + $0x250] sm:$0xff] %vm231, %v1216
        %1266 = vst.msk [vmem:[%s1243 + $0x260] sm:$0xff] %vm231, %v1219
        %1267 = vst.msk [vmem:[%s1243 + $0x270] sm:$0xff] %vm231, %v1221
        %1268 = vst.msk [vmem:[%s1243 + $0x300] sm:$0xff] %vm231, %v1224
        %1269 = vst.msk [vmem:[%s1243 + $0x310] sm:$0xff] %vm231, %v1226
        %1270 = vst.msk [vmem:[%s1243 + $0x320] sm:$0xff] %vm231, %v1229
        %1271 = vst.msk [vmem:[%s1243 + $0x330] sm:$0xff] %vm231, %v1231
        %1272 = vst.msk [vmem:[%s1243 + $0x340] sm:$0xff] %vm231, %v1234
        %1273 = vst.msk [vmem:[%s1243 + $0x350] sm:$0xff] %vm231, %v1236
        %1274 = vst.msk [vmem:[%s1243 + $0x360] sm:$0xff] %vm231, %v1239
        %1275 = vst.msk [vmem:[%s1243 + $0x370] sm:$0xff] %vm231, %v1241
        %s1276 = scalar_lea.vmem %s1, 16
        %v1277 = vld [vmem:[%s1276] sm:$0xf]
        %v1278 = vld [vmem:[%s1276 + $0x4] sm:$0xf]
        %s1279 = scalar_lea.vmem %s2, 2
        %v1280 = vld [vmem:[%s1279] sm:$0x1]
        %v1282 = vperm.slane %v1280, 0
        %v1286 = vunpack.c.l.b16 %v1277
        %v1287 = vunpack.c.l.b16 %v1278
        %v1288 = vpack.c.b16 %v1287, %v1286
        %1290 = vmatpush.bf16.msra.mxu0 0
        %1291 = vmatpush.bf16.msra.mxu0 0
        %1292 = vmatpush.bf16.msra.mxu0 0
        %1293 = vmatpush.bf16.msra.mxu0 0
        %1294 = vmatpush.bf16.msra.mxu0 0
        %1295 = vmatpush.bf16.msra.mxu0 0
        %1296 = vmatpush.bf16.msra.mxu0 0
        %1297 = vmatpush.bf16.msra.mxu0 %v1288
        %1298 = vmatmul.bf16.gmra.mxu0 %v972
        %v1299 = vpop.f32.mrf.mxu0
        %v1300 = vadd.f32 %v1282, %v1299
        %v1301 = vpop.f32.mrf.mxu0
        %v1302 = vadd.f32 %v1282, %v1301
        %1303 = vmatmul.bf16.gmra.mxu0 %v975
        %v1304 = vpop.f32.mrf.mxu0
        %v1305 = vadd.f32 %v1282, %v1304
        %v1306 = vpop.f32.mrf.mxu0
        %v1307 = vadd.f32 %v1282, %v1306
        %1308 = vmatmul.bf16.gmra.mxu0 %v978
        %v1309 = vpop.f32.mrf.mxu0
        %v1310 = vadd.f32 %v1282, %v1309
        %v1311 = vpop.f32.mrf.mxu0
        %v1312 = vadd.f32 %v1282, %v1311
        %1313 = vmatmul.bf16.gmra.mxu0 %v981
        %v1314 = vpop.f32.mrf.mxu0
        %v1315 = vadd.f32 %v1282, %v1314
        %v1316 = vpop.f32.mrf.mxu0
        %v1317 = vadd.f32 %v1282, %v1316
        %1318 = vmatmul.bf16.gmra.mxu0 %v984
        %v1319 = vpop.f32.mrf.mxu0
        %v1320 = vadd.f32 %v1282, %v1319
        %v1321 = vpop.f32.mrf.mxu0
        %v1322 = vadd.f32 %v1282, %v1321
        %1323 = vmatmul.bf16.gmra.mxu0 %v987
        %v1324 = vpop.f32.mrf.mxu0
        %v1325 = vadd.f32 %v1282, %v1324
        %v1326 = vpop.f32.mrf.mxu0
        %v1327 = vadd.f32 %v1282, %v1326
        %1328 = vmatmul.bf16.gmra.mxu0 %v990
        %v1329 = vpop.f32.mrf.mxu0
        %v1330 = vadd.f32 %v1282, %v1329
        %v1331 = vpop.f32.mrf.mxu0
        %v1332 = vadd.f32 %v1282, %v1331
        %1333 = vmatmul.bf16.gmra.mxu0 %v993
        %v1334 = vpop.f32.mrf.mxu0
        %v1335 = vadd.f32 %v1282, %v1334
        %v1336 = vpop.f32.mrf.mxu0
        %v1337 = vadd.f32 %v1282, %v1336
        %1338 = vmatmul.bf16.gmra.mxu0 %v996
        %v1339 = vpop.f32.mrf.mxu0
        %v1340 = vadd.f32 %v1282, %v1339
        %v1341 = vpop.f32.mrf.mxu0
        %v1342 = vadd.f32 %v1282, %v1341
        %1343 = vmatmul.bf16.gmra.mxu0 %v999
        %v1344 = vpop.f32.mrf.mxu0
        %v1345 = vadd.f32 %v1282, %v1344
        %v1346 = vpop.f32.mrf.mxu0
        %v1347 = vadd.f32 %v1282, %v1346
        %1348 = vmatmul.bf16.gmra.mxu0 %v1002
        %v1349 = vpop.f32.mrf.mxu0
        %v1350 = vadd.f32 %v1282, %v1349
        %v1351 = vpop.f32.mrf.mxu0
        %v1352 = vadd.f32 %v1282, %v1351
        %1353 = vmatmul.bf16.gmra.mxu0 %v1005
        %v1354 = vpop.f32.mrf.mxu0
        %v1355 = vadd.f32 %v1282, %v1354
        %v1356 = vpop.f32.mrf.mxu0
        %v1357 = vadd.f32 %v1282, %v1356
        %1358 = vmatmul.bf16.gmra.mxu0 %v1008
        %v1359 = vpop.f32.mrf.mxu0
        %v1360 = vadd.f32 %v1282, %v1359
        %v1361 = vpop.f32.mrf.mxu0
        %v1362 = vadd.f32 %v1282, %v1361
        %1363 = vmatmul.bf16.gmra.mxu0 %v1011
        %v1364 = vpop.f32.mrf.mxu0
        %v1365 = vadd.f32 %v1282, %v1364
        %v1366 = vpop.f32.mrf.mxu0
        %v1367 = vadd.f32 %v1282, %v1366
        %1368 = vmatmul.bf16.gmra.mxu0 %v1014
        %v1369 = vpop.f32.mrf.mxu0
        %v1370 = vadd.f32 %v1282, %v1369
        %v1371 = vpop.f32.mrf.mxu0
        %v1372 = vadd.f32 %v1282, %v1371
        %1373 = vmatmul.bf16.gmra.mxu0 %v1017
        %v1374 = vpop.f32.mrf.mxu0
        %v1375 = vadd.f32 %v1282, %v1374
        %v1376 = vpop.f32.mrf.mxu0
        %v1377 = vadd.f32 %v1282, %v1376
        %1378 = vdwg.mxu0
        %s1379 = scalar_lea.vmem %s196, 128
        %1380 = vst.msk [vmem:[%s1379] sm:$0xff] %vm231, %v1300
        %1381 = vst.msk [vmem:[%s1379 + $0x10] sm:$0xff] %vm231, %v1302
        %1382 = vst.msk [vmem:[%s1379 + $0x20] sm:$0xff] %vm231, %v1305
        %1383 = vst.msk [vmem:[%s1379 + $0x30] sm:$0xff] %vm231, %v1307
        %1384 = vst.msk [vmem:[%s1379 + $0x40] sm:$0xff] %vm231, %v1310
        %1385 = vst.msk [vmem:[%s1379 + $0x50] sm:$0xff] %vm231, %v1312
        %1386 = vst.msk [vmem:[%s1379 + $0x60] sm:$0xff] %vm231, %v1315
        %1387 = vst.msk [vmem:[%s1379 + $0x70] sm:$0xff] %vm231, %v1317
        %1388 = vst.msk [vmem:[%s1379 + $0x100] sm:$0xff] %vm231, %v1320
        %1389 = vst.msk [vmem:[%s1379 + $0x110] sm:$0xff] %vm231, %v1322
        %1390 = vst.msk [vmem:[%s1379 + $0x120] sm:$0xff] %vm231, %v1325
        %1391 = vst.msk [vmem:[%s1379 + $0x130] sm:$0xff] %vm231, %v1327
        %1392 = vst.msk [vmem:[%s1379 + $0x140] sm:$0xff] %vm231, %v1330
        %1393 = vst.msk [vmem:[%s1379 + $0x150] sm:$0xff] %vm231, %v1332
        %1394 = vst.msk [vmem:[%s1379 + $0x160] sm:$0xff] %vm231, %v1335
        %1395 = vst.msk [vmem:[%s1379 + $0x170] sm:$0xff] %vm231, %v1337
        %1396 = vst.msk [vmem:[%s1379 + $0x200] sm:$0xff] %vm231, %v1340
        %1397 = vst.msk [vmem:[%s1379 + $0x210] sm:$0xff] %vm231, %v1342
        %1398 = vst.msk [vmem:[%s1379 + $0x220] sm:$0xff] %vm231, %v1345
        %1399 = vst.msk [vmem:[%s1379 + $0x230] sm:$0xff] %vm231, %v1347
        %1400 = vst.msk [vmem:[%s1379 + $0x240] sm:$0xff] %vm231, %v1350
        %1401 = vst.msk [vmem:[%s1379 + $0x250] sm:$0xff] %vm231, %v1352
        %1402 = vst.msk [vmem:[%s1379 + $0x260] sm:$0xff] %vm231, %v1355
        %1403 = vst.msk [vmem:[%s1379 + $0x270] sm:$0xff] %vm231, %v1357
        %1404 = vst.msk [vmem:[%s1379 + $0x300] sm:$0xff] %vm231, %v1360
        %1405 = vst.msk [vmem:[%s1379 + $0x310] sm:$0xff] %vm231, %v1362
        %1406 = vst.msk [vmem:[%s1379 + $0x320] sm:$0xff] %vm231, %v1365
        %1407 = vst.msk [vmem:[%s1379 + $0x330] sm:$0xff] %vm231, %v1367
        %1408 = vst.msk [vmem:[%s1379 + $0x340] sm:$0xff] %vm231, %v1370
        %1409 = vst.msk [vmem:[%s1379 + $0x350] sm:$0xff] %vm231, %v1372
        %1410 = vst.msk [vmem:[%s1379 + $0x360] sm:$0xff] %vm231, %v1375
        %1411 = vst.msk [vmem:[%s1379 + $0x370] sm:$0xff] %vm231, %v1377
        %s1412 = scalar_lea.vmem %s1, 24
        %v1413 = vld [vmem:[%s1412] sm:$0xf]
        %v1414 = vld [vmem:[%s1412 + $0x4] sm:$0xf]
        %s1415 = scalar_lea.vmem %s2, 3
        %v1416 = vld [vmem:[%s1415] sm:$0x1]
        %v1418 = vperm.slane %v1416, 0
        %v1422 = vunpack.c.l.b16 %v1413
        %v1423 = vunpack.c.l.b16 %v1414
        %v1424 = vpack.c.b16 %v1423, %v1422
        %1426 = vmatpush.bf16.msra.mxu0 0
        %1427 = vmatpush.bf16.msra.mxu0 0
        %1428 = vmatpush.bf16.msra.mxu0 0
        %1429 = vmatpush.bf16.msra.mxu0 0
        %1430 = vmatpush.bf16.msra.mxu0 0
        %1431 = vmatpush.bf16.msra.mxu0 0
        %1432 = vmatpush.bf16.msra.mxu0 0
        %1433 = vmatpush.bf16.msra.mxu0 %v1424
        %1434 = vmatmul.bf16.gmra.mxu0 %v972
        %v1435 = vpop.f32.mrf.mxu0
        %v1436 = vadd.f32 %v1418, %v1435
        %v1437 = vpop.f32.mrf.mxu0
        %v1438 = vadd.f32 %v1418, %v1437
        %1439 = vmatmul.bf16.gmra.mxu0 %v975
        %v1440 = vpop.f32.mrf.mxu0
        %v1441 = vadd.f32 %v1418, %v1440
        %v1442 = vpop.f32.mrf.mxu0
        %v1443 = vadd.f32 %v1418, %v1442
        %1444 = vmatmul.bf16.gmra.mxu0 %v978
        %v1445 = vpop.f32.mrf.mxu0
        %v1446 = vadd.f32 %v1418, %v1445
        %v1447 = vpop.f32.mrf.mxu0
        %v1448 = vadd.f32 %v1418, %v1447
        %1449 = vmatmul.bf16.gmra.mxu0 %v981
        %v1450 = vpop.f32.mrf.mxu0
        %v1451 = vadd.f32 %v1418, %v1450
        %v1452 = vpop.f32.mrf.mxu0
        %v1453 = vadd.f32 %v1418, %v1452
        %1454 = vmatmul.bf16.gmra.mxu0 %v984
        %v1455 = vpop.f32.mrf.mxu0
        %v1456 = vadd.f32 %v1418, %v1455
        %v1457 = vpop.f32.mrf.mxu0
        %v1458 = vadd.f32 %v1418, %v1457
        %1459 = vmatmul.bf16.gmra.mxu0 %v987
        %v1460 = vpop.f32.mrf.mxu0
        %v1461 = vadd.f32 %v1418, %v1460
        %v1462 = vpop.f32.mrf.mxu0
        %v1463 = vadd.f32 %v1418, %v1462
        %1464 = vmatmul.bf16.gmra.mxu0 %v990
        %v1465 = vpop.f32.mrf.mxu0
        %v1466 = vadd.f32 %v1418, %v1465
        %v1467 = vpop.f32.mrf.mxu0
        %v1468 = vadd.f32 %v1418, %v1467
        %1469 = vmatmul.bf16.gmra.mxu0 %v993
        %v1470 = vpop.f32.mrf.mxu0
        %v1471 = vadd.f32 %v1418, %v1470
        %v1472 = vpop.f32.mrf.mxu0
        %v1473 = vadd.f32 %v1418, %v1472
        %1474 = vmatmul.bf16.gmra.mxu0 %v996
        %v1475 = vpop.f32.mrf.mxu0
        %v1476 = vadd.f32 %v1418, %v1475
        %v1477 = vpop.f32.mrf.mxu0
        %v1478 = vadd.f32 %v1418, %v1477
        %1479 = vmatmul.bf16.gmra.mxu0 %v999
        %v1480 = vpop.f32.mrf.mxu0
        %v1481 = vadd.f32 %v1418, %v1480
        %v1482 = vpop.f32.mrf.mxu0
        %v1483 = vadd.f32 %v1418, %v1482
        %1484 = vmatmul.bf16.gmra.mxu0 %v1002
        %v1485 = vpop.f32.mrf.mxu0
        %v1486 = vadd.f32 %v1418, %v1485
        %v1487 = vpop.f32.mrf.mxu0
        %v1488 = vadd.f32 %v1418, %v1487
        %1489 = vmatmul.bf16.gmra.mxu0 %v1005
        %v1490 = vpop.f32.mrf.mxu0
        %v1491 = vadd.f32 %v1418, %v1490
        %v1492 = vpop.f32.mrf.mxu0
        %v1493 = vadd.f32 %v1418, %v1492
        %1494 = vmatmul.bf16.gmra.mxu0 %v1008
        %v1495 = vpop.f32.mrf.mxu0
        %v1496 = vadd.f32 %v1418, %v1495
        %v1497 = vpop.f32.mrf.mxu0
        %v1498 = vadd.f32 %v1418, %v1497
        %1499 = vmatmul.bf16.gmra.mxu0 %v1011
        %v1500 = vpop.f32.mrf.mxu0
        %v1501 = vadd.f32 %v1418, %v1500
        %v1502 = vpop.f32.mrf.mxu0
        %v1503 = vadd.f32 %v1418, %v1502
        %1504 = vmatmul.bf16.gmra.mxu0 %v1014
        %v1505 = vpop.f32.mrf.mxu0
        %v1506 = vadd.f32 %v1418, %v1505
        %v1507 = vpop.f32.mrf.mxu0
        %v1508 = vadd.f32 %v1418, %v1507
        %1509 = vmatmul.bf16.gmra.mxu0 %v1017
        %v1510 = vpop.f32.mrf.mxu0
        %v1511 = vadd.f32 %v1418, %v1510
        %v1512 = vpop.f32.mrf.mxu0
        %v1513 = vadd.f32 %v1418, %v1512
        %1514 = vdwg.mxu0
        %s1515 = scalar_lea.vmem %s196, 136
        %1516 = vst.msk [vmem:[%s1515] sm:$0xff] %vm231, %v1436
        %1517 = vst.msk [vmem:[%s1515 + $0x10] sm:$0xff] %vm231, %v1438
        %1518 = vst.msk [vmem:[%s1515 + $0x20] sm:$0xff] %vm231, %v1441
        %1519 = vst.msk [vmem:[%s1515 + $0x30] sm:$0xff] %vm231, %v1443
        %1520 = vst.msk [vmem:[%s1515 + $0x40] sm:$0xff] %vm231, %v1446
        %1521 = vst.msk [vmem:[%s1515 + $0x50] sm:$0xff] %vm231, %v1448
        %1522 = vst.msk [vmem:[%s1515 + $0x60] sm:$0xff] %vm231, %v1451
        %1523 = vst.msk [vmem:[%s1515 + $0x70] sm:$0xff] %vm231, %v1453
        %1524 = vst.msk [vmem:[%s1515 + $0x100] sm:$0xff] %vm231, %v1456
        %1525 = vst.msk [vmem:[%s1515 + $0x110] sm:$0xff] %vm231, %v1458
        %1526 = vst.msk [vmem:[%s1515 + $0x120] sm:$0xff] %vm231, %v1461
        %1527 = vst.msk [vmem:[%s1515 + $0x130] sm:$0xff] %vm231, %v1463
        %1528 = vst.msk [vmem:[%s1515 + $0x140] sm:$0xff] %vm231, %v1466
        %1529 = vst.msk [vmem:[%s1515 + $0x150] sm:$0xff] %vm231, %v1468
        %1530 = vst.msk [vmem:[%s1515 + $0x160] sm:$0xff] %vm231, %v1471
        %1531 = vst.msk [vmem:[%s1515 + $0x170] sm:$0xff] %vm231, %v1473
        %1532 = vst.msk [vmem:[%s1515 + $0x200] sm:$0xff] %vm231, %v1476
        %1533 = vst.msk [vmem:[%s1515 + $0x210] sm:$0xff] %vm231, %v1478
        %1534 = vst.msk [vmem:[%s1515 + $0x220] sm:$0xff] %vm231, %v1481
        %1535 = vst.msk [vmem:[%s1515 + $0x230] sm:$0xff] %vm231, %v1483
        %1536 = vst.msk [vmem:[%s1515 + $0x240] sm:$0xff] %vm231, %v1486
        %1537 = vst.msk [vmem:[%s1515 + $0x250] sm:$0xff] %vm231, %v1488
        %1538 = vst.msk [vmem:[%s1515 + $0x260] sm:$0xff] %vm231, %v1491
        %1539 = vst.msk [vmem:[%s1515 + $0x270] sm:$0xff] %vm231, %v1493
        %1540 = vst.msk [vmem:[%s1515 + $0x300] sm:$0xff] %vm231, %v1496
        %1541 = vst.msk [vmem:[%s1515 + $0x310] sm:$0xff] %vm231, %v1498
        %1542 = vst.msk [vmem:[%s1515 + $0x320] sm:$0xff] %vm231, %v1501
        %1543 = vst.msk [vmem:[%s1515 + $0x330] sm:$0xff] %vm231, %v1503
        %1544 = vst.msk [vmem:[%s1515 + $0x340] sm:$0xff] %vm231, %v1506
        %1545 = vst.msk [vmem:[%s1515 + $0x350] sm:$0xff] %vm231, %v1508
        %1546 = vst.msk [vmem:[%s1515 + $0x360] sm:$0xff] %vm231, %v1511
        %1547 = vst.msk [vmem:[%s1515 + $0x370] sm:$0xff] %vm231, %v1513
        %s1548 = smul.u32 4, %s17
        %p1549 = scmp.lt.s32.totalorder %s1548, 7
        %s1550 = scalar_select %p1549, %s1548, 7
        %s1551 = smul.addr %s1550, 32
        %s1552 = smul.addr %s1551, 8
        %s1553 = scalar_lea.vmem %s3, %s1552
        // Predicated region
        $region37: #{patch_expanding.1} parent=31 // pred_check
          %p1554 = pneg %p103
        $region38: #{patch_expanding.1} parent=31 // pred_check_branch
          %1556 = sbr.rel (%p1554) target = $region40
        $region39: #{patch_expanding.1} parent=31 // pred_region
          %s1557 = smul.u32 4, %s17
        $region40: #{patch_expanding.1} parent=31 // pred_fallthru
          _
      $region32: #{patch_expanding.1} parent=5 // pred_fallthru
        _
      %p1558 = scmp.le.s32.totalorder 2, %s12
      // Predicated region
      $region41: #{patch_expanding.1} parent=5 // pred_check
        %p1559 = pneg %p1558
      $region42: #{patch_expanding.1} parent=5 // pred_check_branch
        %1561 = sbr.rel (%p1559) target = $region44
      $region43: #{patch_expanding.1} parent=5 // pred_region
        %s1562 = ssub.s32 %s12, 2
        // Predicated region
        $region45: #{patch_expanding.1} parent=43 // pred_check
          %p1563 = pneg %p109
        $region46: #{patch_expanding.1} parent=43 // pred_check_branch
          %1565 = sbr.rel (%p1563) target = $region48
        $region47: #{patch_expanding.1} parent=43 // pred_region
          %s1566 = smul.u32 4, %s18
          %p1567 = scmp.lt.s32.totalorder %s1566, 7
          %s1568 = scalar_select %p1567, %s1566, 7
          %s1569 = smul.addr %s1568, 32
          %s1570 = smul.addr %s1569, 8
          %s1571 = scalar_lea.vmem %s3, %s1570
        $region48: #{patch_expanding.1} parent=43 // pred_fallthru
          _
      $region44: #{patch_expanding.1} parent=5 // pred_fallthru
        _
    $region6: #{patch_expanding.1} parent=1 // loop_footer
      %s16 = sadd.s32 1, %s12
    $region7: #{patch_expanding.1} parent=1 // loop_footer_branch
      %11 = sbr.rel target = $region3
    $region8: #{patch_expanding.1} parent=1 // loop_exit
      _
    %1572 = vsyncpa [#allocation3], 1
    %s1573 = scalar_lea.sflag [#allocation3], 1
    %1574 = vsyncpa %s1573, 1

</llo_original>
